<compile_context>
chip_gen: v5e
topology: v5e:2x2
jax: 0.10.0
libtpu: 0.0.40
codegen_flags: <defaults>
</compile_context>

<pallas_src>
import jax
import jax.numpy as jnp
from jax.experimental import pallas as pl
from jax.experimental.pallas import tpu as pltpu

D_IN, H1, H2, H3, D_OUT = 1024, 512, 256, 128, 51
D_OUT_PAD = 128  # lane-aligned output slab; only the first 51 columns are real


def mlp_kernel(x_ref, w1_ref, b1_ref, w2_ref, b2_ref, w3_ref, b3_ref,
               w4_ref, b4_ref, o_ref):
    # Whole MLP fused: 4 MXU matmuls (bf16 inputs, f32 accumulation) with
    # VPU bias-add / ReLU kept in f32. x arrives f32 and is cast in-kernel.
    h = jnp.dot(x_ref[...].astype(jnp.bfloat16), w1_ref[...],
                preferred_element_type=jnp.float32) + b1_ref[...]
    h = jnp.maximum(h, 0.0)
    h = jnp.dot(h.astype(jnp.bfloat16), w2_ref[...],
                preferred_element_type=jnp.float32) + b2_ref[...]
    h = jnp.maximum(h, 0.0)
    h = jnp.dot(h.astype(jnp.bfloat16), w3_ref[...],
                preferred_element_type=jnp.float32) + b3_ref[...]
    h = jnp.maximum(h, 0.0)
    h = jnp.dot(h.astype(jnp.bfloat16), w4_ref[...],
                preferred_element_type=jnp.float32) + b4_ref[...]
    o_ref[...] = h.astype(o_ref.dtype)


def _round_up(v, m):
    return (v + m - 1) // m * m


def _vmem_capacity_bytes():
    try:
        return int(pltpu.get_tpu_info().vmem_capacity_bytes)
    except Exception:
        return 64 << 20  # conservative default (v7x per-TC VMEM)


def _choose_tb(B, cap):
    """Batch tile: one grid step whenever the batch fits the cap (single-TC chips get
    no benefit from splitting); otherwise split into evenly balanced 8-row-aligned
    tiles so the multi-step grid (and v7x's second TensorCore) has no straggler."""
    b8 = _round_up(max(B, 1), 8)
    if b8 <= cap:
        return b8
    nsteps = pl.cdiv(b8, cap)
    return _round_up(pl.cdiv(b8, nsteps), 8)


def prepare_params(params):
    """One-time parameter prep: bf16 weights, last layer padded 51->128 output
    columns (zero weight/bias columns), biases kept as (1, out) f32 rows."""
    (w1, b1), (w2, b2), (w3, b3), (w4, b4) = params
    w4p = jnp.pad(w4, ((0, 0), (0, D_OUT_PAD - D_OUT)))
    b4p = jnp.pad(b4, ((0, 0), (0, D_OUT_PAD - D_OUT)))
    return (w1.astype(jnp.bfloat16), b1,
            w2.astype(jnp.bfloat16), b2,
            w3.astype(jnp.bfloat16), b3,
            w4p.astype(jnp.bfloat16), b4p)


def make_skeleton_forward(x, prepared):
    """x: (B, 1024) float32, prepared = prepare_params(params) -> (B, 51) float32."""
    w1b, b1, w2b, b2, w3b, b3, w4b, b4p = prepared
    B = x.shape[0]

    vmem = _vmem_capacity_bytes()
    cap = 2048 if vmem >= (96 << 20) else 1024   # big tiles on 128 MiB chips, 1024 on v7x
    vmem_limit = (vmem * 3) // 4                 # leave headroom below physical VMEM

    TB = _choose_tb(B, cap)
    Bp = _round_up(B, TB)
    if Bp != B:
        x = jnp.pad(x, ((0, Bp - B), (0, 0)))

    # Constant block indices keep the ~1.4 MB of bf16 weights resident in VMEM
    # across grid steps (only the x / out tiles stream).
    full = lambda shape: pl.BlockSpec(shape, lambda i: (0, 0))

    flops = 2 * Bp * (D_IN * H1 + H1 * H2 + H2 * H3 + H3 * D_OUT_PAD)
    weight_bytes = 2 * (D_IN * H1 + H1 * H2 + H2 * H3 + H3 * D_OUT_PAD)
    bias_bytes = 4 * (H1 + H2 + H3 + D_OUT_PAD)
    bytes_accessed = Bp * D_IN * 4 + weight_bytes + bias_bytes + Bp * D_OUT_PAD * 2

    # TODO(synk): optional small-B latency win: keep w2..w4 in pl.ANY and overlap their
    # DMA under the layer-1 matmul with make_async_copy (skipped; marginal here).
    out = pl.pallas_call(
        mlp_kernel,
        out_shape=jax.ShapeDtypeStruct((Bp, D_OUT_PAD), jnp.bfloat16),
        grid_spec=pltpu.PrefetchScalarGridSpec(
            num_scalar_prefetch=0,
            grid=(Bp // TB,),
            in_specs=[
                pl.BlockSpec((TB, D_IN), lambda i: (i, 0)),   # f32 x streams per step
                full((D_IN, H1)), full((1, H1)),
                full((H1, H2)), full((1, H2)),
                full((H2, H3)), full((1, H3)),
                full((H3, D_OUT_PAD)), full((1, D_OUT_PAD)),
            ],
            out_specs=pl.BlockSpec((TB, D_OUT_PAD), lambda i: (i, 0)),
        ),
        compiler_params=pltpu.CompilerParams(
            dimension_semantics=("parallel",),
            vmem_limit_bytes=vmem_limit),
        cost_estimate=pl.CostEstimate(
            flops=flops, transcendentals=0, bytes_accessed=bytes_accessed),
    )(x, w1b, b1, w2b, b2, w3b, b3, w4b, b4p)
    # Slice off batch/column padding; restore the module's f32 output dtype
    # (cheap: only (B, 51) elements).
    return out[:B, :D_OUT].astype(jnp.float32)


def init_params(key):
    """Deterministic init mimicking PyTorch Linear default (U[-1/sqrt(fan_in), +])."""
    dims = [(D_IN, H1), (H1, H2), (H2, H3), (H3, D_OUT)]
    params = []
    for li, (fin, fout) in enumerate(dims):
        kw, kb = jax.random.split(jax.random.fold_in(key, li))
        bound = 1.0 / jnp.sqrt(fin)
        w = jax.random.uniform(kw, (fin, fout), jnp.float32, -bound, bound)
        b = jax.random.uniform(kb, (1, fout), jnp.float32, -bound, bound)
        params.append((w, b))
    return params


def reference_forward(x, params):
    h = x
    for i, (w, b) in enumerate(params):
        h = h @ w + b
        if i < len(params) - 1:
            h = jnp.maximum(h, 0.0)
    return h


if __name__ == "__main__":
    key = jax.random.PRNGKey(0)
    kx, kp = jax.random.split(key)
    params = init_params(kp)
    prepared = prepare_params(params)   # one-time weight cast / pad, amortized

    # Small batch (consistent with the module's 1024-feature input): grid = 1 step.
    B = 2
    x = jax.random.normal(kx, (B, D_IN), jnp.float32)
    out = jax.block_until_ready(make_skeleton_forward(x, prepared))
    ref = reference_forward(x, params)
    assert out.shape == (B, D_OUT)
    assert jnp.allclose(out, ref, atol=2e-2, rtol=2e-2), \
        float(jnp.max(jnp.abs(out - ref)))

    # Non-multiple batch: exercises 8-row padding while still using a single grid step.
    B2 = 300
    x2 = jax.random.normal(jax.random.fold_in(kx, 1), (B2, D_IN), jnp.float32)
    out2 = jax.block_until_ready(make_skeleton_forward(x2, prepared))
    ref2 = reference_forward(x2, params)
    assert out2.shape == (B2, D_OUT)
    assert jnp.allclose(out2, ref2, atol=2e-2, rtol=2e-2), \
        float(jnp.max(jnp.abs(out2 - ref2)))

    print("KERNEL_OK")
</pallas_src>

<mosaic_0001>
module attributes {stable_mosaic.version = 11 : i64} {
  func.func @mlp_kernel(%arg0: i32, %arg1: memref<8x1024xf32, #tpu.memory_space<vmem>>, %arg2: memref<1024x512xbf16, #tpu.memory_space<vmem>>, %arg3: memref<1x512xf32, #tpu.memory_space<vmem>>, %arg4: memref<512x256xbf16, #tpu.memory_space<vmem>>, %arg5: memref<1x256xf32, #tpu.memory_space<vmem>>, %arg6: memref<256x128xbf16, #tpu.memory_space<vmem>>, %arg7: memref<1x128xf32, #tpu.memory_space<vmem>>, %arg8: memref<128x128xbf16, #tpu.memory_space<vmem>>, %arg9: memref<1x128xf32, #tpu.memory_space<vmem>>, %arg10: memref<8x128xbf16, #tpu.memory_space<vmem>>) attributes {dimension_semantics = [#tpu.dimension_semantics<parallel>], iteration_bounds = array<i64: 1>, scalar_prefetch = 0 : i64, scratch_operands = 0 : i64, tpu.core_type = #tpu.core_type<tc>, window_params = [{transform_indices = @transform_0, window_bounds = array<i64: 8, 1024>}, {pipeline_mode = #tpu.pipeline_mode<synchronous>, transform_indices = @transform_1, window_bounds = array<i64: 1024, 512>}, {pipeline_mode = #tpu.pipeline_mode<synchronous>, transform_indices = @transform_2, window_bounds = array<i64: 1, 512>}, {pipeline_mode = #tpu.pipeline_mode<synchronous>, transform_indices = @transform_3, window_bounds = array<i64: 512, 256>}, {pipeline_mode = #tpu.pipeline_mode<synchronous>, transform_indices = @transform_4, window_bounds = array<i64: 1, 256>}, {pipeline_mode = #tpu.pipeline_mode<synchronous>, transform_indices = @transform_5, window_bounds = array<i64: 256, 128>}, {pipeline_mode = #tpu.pipeline_mode<synchronous>, transform_indices = @transform_6, window_bounds = array<i64: 1, 128>}, {pipeline_mode = #tpu.pipeline_mode<synchronous>, transform_indices = @transform_7, window_bounds = array<i64: 128, 128>}, {pipeline_mode = #tpu.pipeline_mode<synchronous>, transform_indices = @transform_8, window_bounds = array<i64: 1, 128>}, {transform_indices = @transform_9, window_bounds = array<i64: 8, 128>}]} {
    %c0 = arith.constant 0 : index
    %c0_0 = arith.constant 0 : index
    %0 = vector.load %arg1[%c0, %c0_0] : memref<8x1024xf32, #tpu.memory_space<vmem>>, vector<8x1024xf32>
    %1 = arith.truncf %0 : vector<8x1024xf32> to vector<8x1024xbf16>
    %c0_1 = arith.constant 0 : index
    %c0_2 = arith.constant 0 : index
    %2 = vector.load %arg2[%c0_1, %c0_2] : memref<1024x512xbf16, #tpu.memory_space<vmem>>, vector<1024x512xbf16>
    %cst = arith.constant dense<0.000000e+00> : vector<8x512xf32>
    %3 = tpu.matmul %1, %2, %cst {dimension_numbers = #tpu.dot_dimension_numbers<[1], [0], [0], [1], [0, 0, 1, 1], [], []>} : vector<8x1024xbf16>, vector<1024x512xbf16>, vector<8x512xf32> -> vector<8x512xf32>
    %c0_3 = arith.constant 0 : index
    %c0_4 = arith.constant 0 : index
    %4 = vector.load %arg3[%c0_3, %c0_4] : memref<1x512xf32, #tpu.memory_space<vmem>>, vector<1x512xf32>
    %5 = vector.broadcast %4 : vector<1x512xf32> to vector<8x512xf32>
    %6 = arith.addf %3, %5 : vector<8x512xf32>
    %cst_5 = arith.constant 0.000000e+00 : f32
    %7 = vector.broadcast %cst_5 : f32 to vector<8x512xf32>
    %8 = arith.maximumf %6, %7 : vector<8x512xf32>
    %9 = arith.truncf %8 : vector<8x512xf32> to vector<8x512xbf16>
    %c0_6 = arith.constant 0 : index
    %c0_7 = arith.constant 0 : index
    %10 = vector.load %arg4[%c0_6, %c0_7] : memref<512x256xbf16, #tpu.memory_space<vmem>>, vector<512x256xbf16>
    %cst_8 = arith.constant dense<0.000000e+00> : vector<8x256xf32>
    %11 = tpu.matmul %9, %10, %cst_8 {dimension_numbers = #tpu.dot_dimension_numbers<[1], [0], [0], [1], [0, 0, 1, 1], [], []>} : vector<8x512xbf16>, vector<512x256xbf16>, vector<8x256xf32> -> vector<8x256xf32>
    %c0_9 = arith.constant 0 : index
    %c0_10 = arith.constant 0 : index
    %12 = vector.load %arg5[%c0_9, %c0_10] : memref<1x256xf32, #tpu.memory_space<vmem>>, vector<1x256xf32>
    %13 = vector.broadcast %12 : vector<1x256xf32> to vector<8x256xf32>
    %14 = arith.addf %11, %13 : vector<8x256xf32>
    %cst_11 = arith.constant 0.000000e+00 : f32
    %15 = vector.broadcast %cst_11 : f32 to vector<8x256xf32>
    %16 = arith.maximumf %14, %15 : vector<8x256xf32>
    %17 = arith.truncf %16 : vector<8x256xf32> to vector<8x256xbf16>
    %c0_12 = arith.constant 0 : index
    %c0_13 = arith.constant 0 : index
    %18 = vector.load %arg6[%c0_12, %c0_13] : memref<256x128xbf16, #tpu.memory_space<vmem>>, vector<256x128xbf16>
    %cst_14 = arith.constant dense<0.000000e+00> : vector<8x128xf32>
    %19 = tpu.matmul %17, %18, %cst_14 {dimension_numbers = #tpu.dot_dimension_numbers<[1], [0], [0], [1], [0, 0, 1, 1], [], []>} : vector<8x256xbf16>, vector<256x128xbf16>, vector<8x128xf32> -> vector<8x128xf32>
    %c0_15 = arith.constant 0 : index
    %c0_16 = arith.constant 0 : index
    %20 = vector.load %arg7[%c0_15, %c0_16] : memref<1x128xf32, #tpu.memory_space<vmem>>, vector<1x128xf32>
    %21 = vector.broadcast %20 : vector<1x128xf32> to vector<8x128xf32>
    %22 = arith.addf %19, %21 : vector<8x128xf32>
    %cst_17 = arith.constant 0.000000e+00 : f32
    %23 = vector.broadcast %cst_17 : f32 to vector<8x128xf32>
    %24 = arith.maximumf %22, %23 : vector<8x128xf32>
    %25 = arith.truncf %24 : vector<8x128xf32> to vector<8x128xbf16>
    %c0_18 = arith.constant 0 : index
    %c0_19 = arith.constant 0 : index
    %26 = vector.load %arg8[%c0_18, %c0_19] : memref<128x128xbf16, #tpu.memory_space<vmem>>, vector<128x128xbf16>
    %cst_20 = arith.constant dense<0.000000e+00> : vector<8x128xf32>
    %27 = tpu.matmul %25, %26, %cst_20 {dimension_numbers = #tpu.dot_dimension_numbers<[1], [0], [0], [1], [0, 0, 1, 1], [], []>} : vector<8x128xbf16>, vector<128x128xbf16>, vector<8x128xf32> -> vector<8x128xf32>
    %c0_21 = arith.constant 0 : index
    %c0_22 = arith.constant 0 : index
    %28 = vector.load %arg9[%c0_21, %c0_22] : memref<1x128xf32, #tpu.memory_space<vmem>>, vector<1x128xf32>
    %29 = vector.broadcast %28 : vector<1x128xf32> to vector<8x128xf32>
    %30 = arith.addf %27, %29 : vector<8x128xf32>
    %31 = arith.truncf %30 : vector<8x128xf32> to vector<8x128xbf16>
    %c0_23 = arith.constant 0 : index
    %c0_24 = arith.constant 0 : index
    %32 = vector.load %arg10[%c0_23, %c0_24] : memref<8x128xbf16, #tpu.memory_space<vmem>>, vector<8x128xbf16>
    tpu.vector_store %arg10[%c0_23, %c0_24], %31 {strides = array<i32>} : memref<8x128xbf16, #tpu.memory_space<vmem>>, vector<8x128xbf16>,
    return
  }
  func.func @transform_0(%arg0: i32) -> (i32, i32) {
    %c0_i32 = arith.constant 0 : i32
    %c0_i32_0 = arith.constant 0 : i32
    return %arg0, %c0_i32 : i32, i32
  }
  func.func @transform_1(%arg0: i32) -> (i32, i32) {
    %c0_i32 = arith.constant 0 : i32
    %c0_i32_0 = arith.constant 0 : i32
    %c0_i32_1 = arith.constant 0 : i32
    return %c0_i32, %c0_i32_0 : i32, i32
  }
  func.func @transform_2(%arg0: i32) -> (i32, i32) {
    %c0_i32 = arith.constant 0 : i32
    %c0_i32_0 = arith.constant 0 : i32
    %c0_i32_1 = arith.constant 0 : i32
    return %c0_i32, %c0_i32_0 : i32, i32
  }
  func.func @transform_3(%arg0: i32) -> (i32, i32) {
    %c0_i32 = arith.constant 0 : i32
    %c0_i32_0 = arith.constant 0 : i32
    %c0_i32_1 = arith.constant 0 : i32
    return %c0_i32, %c0_i32_0 : i32, i32
  }
  func.func @transform_4(%arg0: i32) -> (i32, i32) {
    %c0_i32 = arith.constant 0 : i32
    %c0_i32_0 = arith.constant 0 : i32
    %c0_i32_1 = arith.constant 0 : i32
    return %c0_i32, %c0_i32_0 : i32, i32
  }
  func.func @transform_5(%arg0: i32) -> (i32, i32) {
    %c0_i32 = arith.constant 0 : i32
    %c0_i32_0 = arith.constant 0 : i32
    %c0_i32_1 = arith.constant 0 : i32
    return %c0_i32, %c0_i32_0 : i32, i32
  }
  func.func @transform_6(%arg0: i32) -> (i32, i32) {
    %c0_i32 = arith.constant 0 : i32
    %c0_i32_0 = arith.constant 0 : i32
    %c0_i32_1 = arith.constant 0 : i32
    return %c0_i32, %c0_i32_0 : i32, i32
  }
  func.func @transform_7(%arg0: i32) -> (i32, i32) {
    %c0_i32 = arith.constant 0 : i32
    %c0_i32_0 = arith.constant 0 : i32
    %c0_i32_1 = arith.constant 0 : i32
    return %c0_i32, %c0_i32_0 : i32, i32
  }
  func.func @transform_8(%arg0: i32) -> (i32, i32) {
    %c0_i32 = arith.constant 0 : i32
    %c0_i32_0 = arith.constant 0 : i32
    %c0_i32_1 = arith.constant 0 : i32
    return %c0_i32, %c0_i32_0 : i32, i32
  }
  func.func @transform_9(%arg0: i32) -> (i32, i32) {
    %c0_i32 = arith.constant 0 : i32
    %c0_i32_0 = arith.constant 0 : i32
    return %arg0, %c0_i32 : i32, i32
  }
}

</mosaic_0001>

<llo_original>
// kernel: tpu_custom_call.1
$region0: #{tpu_custom_call.1}
  #allocation0 [shape = 'u32[]', space=smem, size = 0x4, offset = 0x4, fixed_abs, tag = 'smem constant byte address 0x4 - core index']
  #allocation1 [shape = 'u32[72,128]{1,0:T(1,128)}', space=vmem, size = 0x9000, scoped, tag = 'internal scratch']
  %s0 = inlined_call_operand.hbm [shape: f32[8,1024], index: 0, kind: input, shape index: {}]
  %s1 = inlined_call_operand.hbm [shape: bf16[1024,512], index: 1, kind: input, shape index: {}]
  %s2 = inlined_call_operand.hbm [shape: f32[1,512], index: 2, kind: input, shape index: {}]
  %s3 = inlined_call_operand.hbm [shape: bf16[512,256], index: 3, kind: input, shape index: {}]
  %s4 = inlined_call_operand.vmem [shape: f32[1,256], index: 4, kind: input, shape index: {}]
  %s5 = inlined_call_operand.hbm [shape: bf16[256,128], index: 5, kind: input, shape index: {}]
  %s6 = inlined_call_operand.vmem [shape: f32[1,128], index: 6, kind: input, shape index: {}]
  %s7 = inlined_call_operand.hbm [shape: bf16[128,128], index: 7, kind: input, shape index: {}]
  %s8 = inlined_call_operand.vmem [shape: f32[1,128], index: 8, kind: input, shape index: {}]
  %s9 = inlined_call_operand.hbm [shape: bf16[8,128], index: 9, kind: output, shape index: {}]
  %s10 = sld [smem:[#allocation0]]
  $region70: #{tpu_custom_call.1} parent=0
    _
  %s12 = ssub.s32 1, %s10
  %s13 = scalar_select 0, %s12, %s10
  $region1: #{tpu_custom_call.1} parent=0
    #allocation2 [shape = 'u8[32768]{0}', space=vmem, size = 0x8000, scoped, tag = 'input window, operand 0, single buffered']
    #allocation3 [shape = 's32[1]{0}', space=sflag, size = 0x4, scoped, tag = 'scoped memory for tpu_custom_call.1']
    #allocation4 [shape = 's32[1]{0}', space=sflag, size = 0x4, scoped, tag = 'scoped memory for tpu_custom_call.1']
    #allocation5 [shape = 'u8[1048576]{0}', space=vmem, size = 0x100000, scoped, tag = 'input window, operand 1, single buffered']
    #allocation6 [shape = 's32[1]{0}', space=sflag, size = 0x4, scoped, tag = 'scoped memory for tpu_custom_call.1']
    #allocation7 [shape = 'u8[2048]{0}', space=vmem, size = 0x800, scoped, tag = 'input window, operand 2, single buffered']
    #allocation8 [shape = 'u8[262144]{0}', space=vmem, size = 0x40000, scoped, tag = 'input window, operand 3, single buffered']
    #allocation9 [shape = 's32[1]{0}', space=sflag, size = 0x4, scoped, tag = 'scoped memory for tpu_custom_call.1']
    #allocation10 [shape = 'u8[65536]{0}', space=vmem, size = 0x10000, scoped, tag = 'input window, operand 5, single buffered']
    #allocation11 [shape = 'u8[32768]{0}', space=vmem, size = 0x8000, scoped, tag = 'input window, operand 7, single buffered']
    #allocation12 [shape = 's32[1]{0}', space=sflag, size = 0x4, scoped, tag = 'scoped memory for tpu_custom_call.1']
    #allocation13 [shape = 'u8[2048]{0}', space=vmem, size = 0x800, scoped, tag = 'output window, operand 0, single buffered']
    %14 = vsyncpa [#allocation3], 0
    %15 = vsyncpa [#allocation6], 0
    %16 = vsyncpa [#allocation9], 0
    %17 = vsyncpa [#allocation12], 0
    %18 = vsyncpa [#allocation4], 0
    // Predicated region
    $region2: #{tpu_custom_call.1} parent=1 // pred_check
      _
    $region3: #{tpu_custom_call.1} parent=1 // pred_check_branch
      %20 = sbr.rel (0) target = $region5
    $region4: #{tpu_custom_call.1} parent=1 // pred_region
      %22 = vsyncadd [#allocation3], 0
      %s24 = sshll.u32 %s0, 4
      %s25 = int_to_ptr.hbm [resolvable:$true] %s24
      %s26 = sshll.u32 [#allocation2], 4
      %s27 = int_to_ptr.vmem [resolvable:$true] %s26
      %29 = dma.hbm_to_vmem [thread:$0]  %s25, 1024, %s27, [#allocation3]
    $region5: #{tpu_custom_call.1} parent=1 // pred_fallthru
      _
    // Predicated region
    $region6: #{tpu_custom_call.1} parent=1 // pred_check
      _
    $region7: #{tpu_custom_call.1} parent=1 // pred_check_branch
      %31 = sbr.rel (0) target = $region9
    $region8: #{tpu_custom_call.1} parent=1 // pred_region
      %33 = vsyncadd [#allocation6], 0
      %s34 = sshll.u32 %s1, 4
      %s35 = int_to_ptr.hbm [resolvable:$true] %s34
      %s36 = sshll.u32 [#allocation5], 4
      %s37 = int_to_ptr.vmem [resolvable:$true] %s36
      %42 = dma.hbm_to_vmem [thread:$0]  %s35, 32768, %s37, [#allocation6], 256, 256, 16
    $region9: #{tpu_custom_call.1} parent=1 // pred_fallthru
      _
    // Predicated region
    $region10: #{tpu_custom_call.1} parent=1 // pred_check
      _
    $region11: #{tpu_custom_call.1} parent=1 // pred_check_branch
      %44 = sbr.rel (0) target = $region13
    $region12: #{tpu_custom_call.1} parent=1 // pred_region
      %46 = vsyncadd [#allocation6], 0
      %s48 = sshll.u32 %s2, 4
      %s49 = int_to_ptr.hbm [resolvable:$true] %s48
      %s50 = sshll.u32 [#allocation7], 4
      %s51 = int_to_ptr.vmem [resolvable:$true] %s50
      %53 = dma.hbm_to_vmem [thread:$0]  %s49, 64, %s51, [#allocation6]
    $region13: #{tpu_custom_call.1} parent=1 // pred_fallthru
      _
    // Predicated region
    $region14: #{tpu_custom_call.1} parent=1 // pred_check
      _
    $region15: #{tpu_custom_call.1} parent=1 // pred_check_branch
      %55 = sbr.rel (0) target = $region17
    $region16: #{tpu_custom_call.1} parent=1 // pred_region
      %57 = vsyncadd [#allocation9], 0
      %s58 = sshll.u32 %s3, 4
      %s59 = int_to_ptr.hbm [resolvable:$true] %s58
      %s60 = sshll.u32 [#allocation8], 4
      %s61 = int_to_ptr.vmem [resolvable:$true] %s60
      %66 = dma.hbm_to_vmem [thread:$0]  %s59, 8192, %s61, [#allocation9], 128, 128, 8
    $region17: #{tpu_custom_call.1} parent=1 // pred_fallthru
      _
    // Predicated region
    $region18: #{tpu_custom_call.1} parent=1 // pred_check
      _
    $region19: #{tpu_custom_call.1} parent=1 // pred_check_branch
      %68 = sbr.rel (0) target = $region21
    $region20: #{tpu_custom_call.1} parent=1 // pred_region
      _
    $region21: #{tpu_custom_call.1} parent=1 // pred_fallthru
      _
    // Predicated region
    $region22: #{tpu_custom_call.1} parent=1 // pred_check
      _
    $region23: #{tpu_custom_call.1} parent=1 // pred_check_branch
      %70 = sbr.rel (0) target = $region25
    $region24: #{tpu_custom_call.1} parent=1 // pred_region
      %72 = vsyncadd [#allocation9], 0
      %s73 = sshll.u32 %s5, 4
      %s74 = int_to_ptr.hbm [resolvable:$true] %s73
      %s75 = sshll.u32 [#allocation10], 4
      %s76 = int_to_ptr.vmem [resolvable:$true] %s75
      %81 = dma.hbm_to_vmem [thread:$0]  %s74, 2048, %s76, [#allocation9], 64, 64, 4
    $region25: #{tpu_custom_call.1} parent=1 // pred_fallthru
      _
    // Predicated region
    $region26: #{tpu_custom_call.1} parent=1 // pred_check
      _
    $region27: #{tpu_custom_call.1} parent=1 // pred_check_branch
      %83 = sbr.rel (0) target = $region29
    $region28: #{tpu_custom_call.1} parent=1 // pred_region
      _
    $region29: #{tpu_custom_call.1} parent=1 // pred_fallthru
      _
    // Predicated region
    $region30: #{tpu_custom_call.1} parent=1 // pred_check
      _
    $region31: #{tpu_custom_call.1} parent=1 // pred_check_branch
      %85 = sbr.rel (0) target = $region33
    $region32: #{tpu_custom_call.1} parent=1 // pred_region
      %87 = vsyncadd [#allocation12], 0
      %s88 = sshll.u32 %s7, 4
      %s89 = int_to_ptr.hbm [resolvable:$true] %s88
      %s90 = sshll.u32 [#allocation11], 4
      %s91 = int_to_ptr.vmem [resolvable:$true] %s90
      %96 = dma.hbm_to_vmem [thread:$0]  %s89, 1024, %s91, [#allocation12], 64, 64, 4
    $region33: #{tpu_custom_call.1} parent=1 // pred_fallthru
      _
    // Predicated region
    $region34: #{tpu_custom_call.1} parent=1 // pred_check
      _
    $region35: #{tpu_custom_call.1} parent=1 // pred_check_branch
      %98 = sbr.rel (0) target = $region37
    $region36: #{tpu_custom_call.1} parent=1 // pred_region
      _
    $region37: #{tpu_custom_call.1} parent=1 // pred_fallthru
      _
    // Predicated region
    $region38: #{tpu_custom_call.1} parent=1 // pred_check
      _
    $region39: #{tpu_custom_call.1} parent=1 // pred_check_branch
      %100 = sbr.rel (0) target = $region41
    $region40: #{tpu_custom_call.1} parent=1 // pred_region
      %102 = dma.done [#allocation3], 1024
    $region41: #{tpu_custom_call.1} parent=1 // pred_fallthru
      _
    // Predicated region
    $region42: #{tpu_custom_call.1} parent=1 // pred_check
      _
    $region43: #{tpu_custom_call.1} parent=1 // pred_check_branch
      %104 = sbr.rel (0) target = $region45
    $region44: #{tpu_custom_call.1} parent=1 // pred_region
      %106 = dma.done [#allocation6], 32768
    $region45: #{tpu_custom_call.1} parent=1 // pred_fallthru
      _
    // Predicated region
    $region46: #{tpu_custom_call.1} parent=1 // pred_check
      _
    $region47: #{tpu_custom_call.1} parent=1 // pred_check_branch
      %108 = sbr.rel (0) target = $region49
    $region48: #{tpu_custom_call.1} parent=1 // pred_region
      %110 = dma.done [#allocation6], 64
    $region49: #{tpu_custom_call.1} parent=1 // pred_fallthru
      _
    // Predicated region
    $region50: #{tpu_custom_call.1} parent=1 // pred_check
      _
    $region51: #{tpu_custom_call.1} parent=1 // pred_check_branch
      %112 = sbr.rel (0) target = $region53
    $region52: #{tpu_custom_call.1} parent=1 // pred_region
      %114 = dma.done [#allocation9], 8192
    $region53: #{tpu_custom_call.1} parent=1 // pred_fallthru
      _
    // Predicated region
    $region54: #{tpu_custom_call.1} parent=1 // pred_check
      _
    $region55: #{tpu_custom_call.1} parent=1 // pred_check_branch
      %116 = sbr.rel (0) target = $region57
    $region56: #{tpu_custom_call.1} parent=1 // pred_region
      %118 = dma.done [#allocation9], 2048
    $region57: #{tpu_custom_call.1} parent=1 // pred_fallthru
      _
    // Predicated region
    $region58: #{tpu_custom_call.1} parent=1 // pred_check
      _
    $region59: #{tpu_custom_call.1} parent=1 // pred_check_branch
      %120 = sbr.rel (0) target = $region61
    $region60: #{tpu_custom_call.1} parent=1 // pred_region
      %122 = dma.done [#allocation12], 1024
    $region61: #{tpu_custom_call.1} parent=1 // pred_fallthru
      _
    %v123 = vld [vmem:[#allocation2] sm:$0xff]
    %v124 = vld [vmem:[#allocation2 + $0x8] sm:$0xff]
    %v125 = vld [vmem:[#allocation2 + $0x10] sm:$0xff]
    %v126 = vld [vmem:[#allocation2 + $0x18] sm:$0xff]
    %v127 = vld [vmem:[#allocation2 + $0x20] sm:$0xff]
    %v128 = vld [vmem:[#allocation2 + $0x28] sm:$0xff]
    %v129 = vld [vmem:[#allocation2 + $0x30] sm:$0xff]
    %v130 = vld [vmem:[#allocation2 + $0x38] sm:$0xff]
    %v131 = vpack.c.bf16 %v123, %v123
    %v132 = vpack.c.bf16 %v124, %v124
    %v133 = vpack.c.bf16 %v125, %v125
    %v134 = vpack.c.bf16 %v126, %v126
    %v135 = vpack.c.bf16 %v127, %v127
    %v136 = vpack.c.bf16 %v128, %v128
    %v137 = vpack.c.bf16 %v129, %v129
    %v138 = vpack.c.bf16 %v130, %v130
    %v139 = vld [vmem:[#allocation5] sm:$0xff]
    %v140 = vld [vmem:[#allocation5 + $0x8] sm:$0xff]
    %v141 = vld [vmem:[#allocation5 + $0x10] sm:$0xff]
    %v142 = vld [vmem:[#allocation5 + $0x18] sm:$0xff]
    %v143 = vld [vmem:[#allocation5 + $0x20] sm:$0xff]
    %v144 = vld [vmem:[#allocation5 + $0x28] sm:$0xff]
    %v145 = vld [vmem:[#allocation5 + $0x30] sm:$0xff]
    %v146 = vld [vmem:[#allocation5 + $0x38] sm:$0xff]
    %v147 = vld [vmem:[#allocation5 + $0x40] sm:$0xff]
    %v148 = vld [vmem:[#allocation5 + $0x48] sm:$0xff]
    %v149 = vld [vmem:[#allocation5 + $0x50] sm:$0xff]
    %v150 = vld [vmem:[#allocation5 + $0x58] sm:$0xff]
    %v151 = vld [vmem:[#allocation5 + $0x60] sm:$0xff]
    %v152 = vld [vmem:[#allocation5 + $0x68] sm:$0xff]
    %v153 = vld [vmem:[#allocation5 + $0x70] sm:$0xff]
    %v154 = vld [vmem:[#allocation5 + $0x78] sm:$0xff]
    %v155 = vld [vmem:[#allocation5 + $0x80] sm:$0xff]
    %v156 = vld [vmem:[#allocation5 + $0x88] sm:$0xff]
    %v157 = vld [vmem:[#allocation5 + $0x90] sm:$0xff]
    %v158 = vld [vmem:[#allocation5 + $0x98] sm:$0xff]
    %v159 = vld [vmem:[#allocation5 + $0xa0] sm:$0xff]
    %v160 = vld [vmem:[#allocation5 + $0xa8] sm:$0xff]
    %v161 = vld [vmem:[#allocation5 + $0xb0] sm:$0xff]
    %v162 = vld [vmem:[#allocation5 + $0xb8] sm:$0xff]
    %v163 = vld [vmem:[#allocation5 + $0xc0] sm:$0xff]
    %v164 = vld [vmem:[#allocation5 + $0xc8] sm:$0xff]
    %v165 = vld [vmem:[#allocation5 + $0xd0] sm:$0xff]
    %v166 = vld [vmem:[#allocation5 + $0xd8] sm:$0xff]
    %v167 = vld [vmem:[#allocation5 + $0xe0] sm:$0xff]
    %v168 = vld [vmem:[#allocation5 + $0xe8] sm:$0xff]
    %v169 = vld [vmem:[#allocation5 + $0xf0] sm:$0xff]
    %v170 = vld [vmem:[#allocation5 + $0xf8] sm:$0xff]
    %v171 = vld [vmem:[#allocation5 + $0x100] sm:$0xff]
    %v172 = vld [vmem:[#allocation5 + $0x108] sm:$0xff]
    %v173 = vld [vmem:[#allocation5 + $0x110] sm:$0xff]
    %v174 = vld [vmem:[#allocation5 + $0x118] sm:$0xff]
    %v175 = vld [vmem:[#allocation5 + $0x120] sm:$0xff]
    %v176 = vld [vmem:[#allocation5 + $0x128] sm:$0xff]
    %v177 = vld [vmem:[#allocation5 + $0x130] sm:$0xff]
    %v178 = vld [vmem:[#allocation5 + $0x138] sm:$0xff]
    %v179 = vld [vmem:[#allocation5 + $0x140] sm:$0xff]
    %v180 = vld [vmem:[#allocation5 + $0x148] sm:$0xff]
    %v181 = vld [vmem:[#allocation5 + $0x150] sm:$0xff]
    %v182 = vld [vmem:[#allocation5 + $0x158] sm:$0xff]
    %v183 = vld [vmem:[#allocation5 + $0x160] sm:$0xff]
    %v184 = vld [vmem:[#allocation5 + $0x168] sm:$0xff]
    %v185 = vld [vmem:[#allocation5 + $0x170] sm:$0xff]
    %v186 = vld [vmem:[#allocation5 + $0x178] sm:$0xff]
    %v187 = vld [vmem:[#allocation5 + $0x180] sm:$0xff]
    %v188 = vld [vmem:[#allocation5 + $0x188] sm:$0xff]
    %v189 = vld [vmem:[#allocation5 + $0x190] sm:$0xff]
    %v190 = vld [vmem:[#allocation5 + $0x198] sm:$0xff]
    %v191 = vld [vmem:[#allocation5 + $0x1a0] sm:$0xff]
    %v192 = vld [vmem:[#allocation5 + $0x1a8] sm:$0xff]
    %v193 = vld [vmem:[#allocation5 + $0x1b0] sm:$0xff]
    %v194 = vld [vmem:[#allocation5 + $0x1b8] sm:$0xff]
    %v195 = vld [vmem:[#allocation5 + $0x1c0] sm:$0xff]
    %v196 = vld [vmem:[#allocation5 + $0x1c8] sm:$0xff]
    %v197 = vld [vmem:[#allocation5 + $0x1d0] sm:$0xff]
    %v198 = vld [vmem:[#allocation5 + $0x1d8] sm:$0xff]
    %v199 = vld [vmem:[#allocation5 + $0x1e0] sm:$0xff]
    %v200 = vld [vmem:[#allocation5 + $0x1e8] sm:$0xff]
    %v201 = vld [vmem:[#allocation5 + $0x1f0] sm:$0xff]
    %v202 = vld [vmem:[#allocation5 + $0x1f8] sm:$0xff]
    %v203 = vld [vmem:[#allocation5 + $0x200] sm:$0xff]
    %v204 = vld [vmem:[#allocation5 + $0x208] sm:$0xff]
    %v205 = vld [vmem:[#allocation5 + $0x210] sm:$0xff]
    %v206 = vld [vmem:[#allocation5 + $0x218] sm:$0xff]
    %v207 = vld [vmem:[#allocation5 + $0x220] sm:$0xff]
    %v208 = vld [vmem:[#allocation5 + $0x228] sm:$0xff]
    %v209 = vld [vmem:[#allocation5 + $0x230] sm:$0xff]
    %v210 = vld [vmem:[#allocation5 + $0x238] sm:$0xff]
    %v211 = vld [vmem:[#allocation5 + $0x240] sm:$0xff]
    %v212 = vld [vmem:[#allocation5 + $0x248] sm:$0xff]
    %v213 = vld [vmem:[#allocation5 + $0x250] sm:$0xff]
    %v214 = vld [vmem:[#allocation5 + $0x258] sm:$0xff]
    %v215 = vld [vmem:[#allocation5 + $0x260] sm:$0xff]
    %v216 = vld [vmem:[#allocation5 + $0x268] sm:$0xff]
    %v217 = vld [vmem:[#allocation5 + $0x270] sm:$0xff]
    %v218 = vld [vmem:[#allocation5 + $0x278] sm:$0xff]
    %v219 = vld [vmem:[#allocation5 + $0x280] sm:$0xff]
    %v220 = vld [vmem:[#allocation5 + $0x288] sm:$0xff]
    %v221 = vld [vmem:[#allocation5 + $0x290] sm:$0xff]
    %v222 = vld [vmem:[#allocation5 + $0x298] sm:$0xff]
    %v223 = vld [vmem:[#allocation5 + $0x2a0] sm:$0xff]
    %v224 = vld [vmem:[#allocation5 + $0x2a8] sm:$0xff]
    %v225 = vld [vmem:[#allocation5 + $0x2b0] sm:$0xff]
    %v226 = vld [vmem:[#allocation5 + $0x2b8] sm:$0xff]
    %v227 = vld [vmem:[#allocation5 + $0x2c0] sm:$0xff]
    %v228 = vld [vmem:[#allocation5 + $0x2c8] sm:$0xff]
    %v229 = vld [vmem:[#allocation5 + $0x2d0] sm:$0xff]
    %v230 = vld [vmem:[#allocation5 + $0x2d8] sm:$0xff]
    %v231 = vld [vmem:[#allocation5 + $0x2e0] sm:$0xff]
    %v232 = vld [vmem:[#allocation5 + $0x2e8] sm:$0xff]
    %v233 = vld [vmem:[#allocation5 + $0x2f0] sm:$0xff]
    %v234 = vld [vmem:[#allocation5 + $0x2f8] sm:$0xff]
    %v235 = vld [vmem:[#allocation5 + $0x300] sm:$0xff]
    %v236 = vld [vmem:[#allocation5 + $0x308] sm:$0xff]
    %v237 = vld [vmem:[#allocation5 + $0x310] sm:$0xff]
    %v238 = vld [vmem:[#allocation5 + $0x318] sm:$0xff]
    %v239 = vld [vmem:[#allocation5 + $0x320] sm:$0xff]
    %v240 = vld [vmem:[#allocation5 + $0x328] sm:$0xff]
    %v241 = vld [vmem:[#allocation5 + $0x330] sm:$0xff]
    %v242 = vld [vmem:[#allocation5 + $0x338] sm:$0xff]
    %v243 = vld [vmem:[#allocation5 + $0x340] sm:$0xff]
    %v244 = vld [vmem:[#allocation5 + $0x348] sm:$0xff]
    %v245 = vld [vmem:[#allocation5 + $0x350] sm:$0xff]
    %v246 = vld [vmem:[#allocation5 + $0x358] sm:$0xff]
    %v247 = vld [vmem:[#allocation5 + $0x360] sm:$0xff]
    %v248 = vld [vmem:[#allocation5 + $0x368] sm:$0xff]
    %v249 = vld [vmem:[#allocation5 + $0x370] sm:$0xff]
    %v250 = vld [vmem:[#allocation5 + $0x378] sm:$0xff]
    %v251 = vld [vmem:[#allocation5 + $0x380] sm:$0xff]
    %v252 = vld [vmem:[#allocation5 + $0x388] sm:$0xff]
    %v253 = vld [vmem:[#allocation5 + $0x390] sm:$0xff]
    %v254 = vld [vmem:[#allocation5 + $0x398] sm:$0xff]
    %v255 = vld [vmem:[#allocation5 + $0x3a0] sm:$0xff]
    %v256 = vld [vmem:[#allocation5 + $0x3a8] sm:$0xff]
    %v257 = vld [vmem:[#allocation5 + $0x3b0] sm:$0xff]
    %v258 = vld [vmem:[#allocation5 + $0x3b8] sm:$0xff]
    %v259 = vld [vmem:[#allocation5 + $0x3c0] sm:$0xff]
    %v260 = vld [vmem:[#allocation5 + $0x3c8] sm:$0xff]
    %v261 = vld [vmem:[#allocation5 + $0x3d0] sm:$0xff]
    %v262 = vld [vmem:[#allocation5 + $0x3d8] sm:$0xff]
    %v263 = vld [vmem:[#allocation5 + $0x3e0] sm:$0xff]
    %v264 = vld [vmem:[#allocation5 + $0x3e8] sm:$0xff]
    %v265 = vld [vmem:[#allocation5 + $0x3f0] sm:$0xff]
    %v266 = vld [vmem:[#allocation5 + $0x3f8] sm:$0xff]
    %v267 = vld [vmem:[#allocation5 + $0x400] sm:$0xff]
    %v268 = vld [vmem:[#allocation5 + $0x408] sm:$0xff]
    %v269 = vld [vmem:[#allocation5 + $0x410] sm:$0xff]
    %v270 = vld [vmem:[#allocation5 + $0x418] sm:$0xff]
    %v271 = vld [vmem:[#allocation5 + $0x420] sm:$0xff]
    %v272 = vld [vmem:[#allocation5 + $0x428] sm:$0xff]
    %v273 = vld [vmem:[#allocation5 + $0x430] sm:$0xff]
    %v274 = vld [vmem:[#allocation5 + $0x438] sm:$0xff]
    %v275 = vld [vmem:[#allocation5 + $0x440] sm:$0xff]
    %v276 = vld [vmem:[#allocation5 + $0x448] sm:$0xff]
    %v277 = vld [vmem:[#allocation5 + $0x450] sm:$0xff]
    %v278 = vld [vmem:[#allocation5 + $0x458] sm:$0xff]
    %v279 = vld [vmem:[#allocation5 + $0x460] sm:$0xff]
    %v280 = vld [vmem:[#allocation5 + $0x468] sm:$0xff]
    %v281 = vld [vmem:[#allocation5 + $0x470] sm:$0xff]
    %v282 = vld [vmem:[#allocation5 + $0x478] sm:$0xff]
    %v283 = vld [vmem:[#allocation5 + $0x480] sm:$0xff]
    %v284 = vld [vmem:[#allocation5 + $0x488] sm:$0xff]
    %v285 = vld [vmem:[#allocation5 + $0x490] sm:$0xff]
    %v286 = vld [vmem:[#allocation5 + $0x498] sm:$0xff]
    %v287 = vld [vmem:[#allocation5 + $0x4a0] sm:$0xff]
    %v288 = vld [vmem:[#allocation5 + $0x4a8] sm:$0xff]
    %v289 = vld [vmem:[#allocation5 + $0x4b0] sm:$0xff]
    %v290 = vld [vmem:[#allocation5 + $0x4b8] sm:$0xff]
    %v291 = vld [vmem:[#allocation5 + $0x4c0] sm:$0xff]
    %v292 = vld [vmem:[#allocation5 + $0x4c8] sm:$0xff]
    %v293 = vld [vmem:[#allocation5 + $0x4d0] sm:$0xff]
    %v294 = vld [vmem:[#allocation5 + $0x4d8] sm:$0xff]
    %v295 = vld [vmem:[#allocation5 + $0x4e0] sm:$0xff]
    %v296 = vld [vmem:[#allocation5 + $0x4e8] sm:$0xff]
    %v297 = vld [vmem:[#allocation5 + $0x4f0] sm:$0xff]
    %v298 = vld [vmem:[#allocation5 + $0x4f8] sm:$0xff]
    %v299 = vld [vmem:[#allocation5 + $0x500] sm:$0xff]
    %v300 = vld [vmem:[#allocation5 + $0x508] sm:$0xff]
    %v301 = vld [vmem:[#allocation5 + $0x510] sm:$0xff]
    %v302 = vld [vmem:[#allocation5 + $0x518] sm:$0xff]
    %v303 = vld [vmem:[#allocation5 + $0x520] sm:$0xff]
    %v304 = vld [vmem:[#allocation5 + $0x528] sm:$0xff]
    %v305 = vld [vmem:[#allocation5 + $0x530] sm:$0xff]
    %v306 = vld [vmem:[#allocation5 + $0x538] sm:$0xff]
    %v307 = vld [vmem:[#allocation5 + $0x540] sm:$0xff]
    %v308 = vld [vmem:[#allocation5 + $0x548] sm:$0xff]
    %v309 = vld [vmem:[#allocation5 + $0x550] sm:$0xff]
    %v310 = vld [vmem:[#allocation5 + $0x558] sm:$0xff]
    %v311 = vld [vmem:[#allocation5 + $0x560] sm:$0xff]
    %v312 = vld [vmem:[#allocation5 + $0x568] sm:$0xff]
    %v313 = vld [vmem:[#allocation5 + $0x570] sm:$0xff]
    %v314 = vld [vmem:[#allocation5 + $0x578] sm:$0xff]
    %v315 = vld [vmem:[#allocation5 + $0x580] sm:$0xff]
    %v316 = vld [vmem:[#allocation5 + $0x588] sm:$0xff]
    %v317 = vld [vmem:[#allocation5 + $0x590] sm:$0xff]
    %v318 = vld [vmem:[#allocation5 + $0x598] sm:$0xff]
    %v319 = vld [vmem:[#allocation5 + $0x5a0] sm:$0xff]
    %v320 = vld [vmem:[#allocation5 + $0x5a8] sm:$0xff]
    %v321 = vld [vmem:[#allocation5 + $0x5b0] sm:$0xff]
    %v322 = vld [vmem:[#allocation5 + $0x5b8] sm:$0xff]
    %v323 = vld [vmem:[#allocation5 + $0x5c0] sm:$0xff]
    %v324 = vld [vmem:[#allocation5 + $0x5c8] sm:$0xff]
    %v325 = vld [vmem:[#allocation5 + $0x5d0] sm:$0xff]
    %v326 = vld [vmem:[#allocation5 + $0x5d8] sm:$0xff]
    %v327 = vld [vmem:[#allocation5 + $0x5e0] sm:$0xff]
    %v328 = vld [vmem:[#allocation5 + $0x5e8] sm:$0xff]
    %v329 = vld [vmem:[#allocation5 + $0x5f0] sm:$0xff]
    %v330 = vld [vmem:[#allocation5 + $0x5f8] sm:$0xff]
    %v331 = vld [vmem:[#allocation5 + $0x600] sm:$0xff]
    %v332 = vld [vmem:[#allocation5 + $0x608] sm:$0xff]
    %v333 = vld [vmem:[#allocation5 + $0x610] sm:$0xff]
    %v334 = vld [vmem:[#allocation5 + $0x618] sm:$0xff]
    %v335 = vld [vmem:[#allocation5 + $0x620] sm:$0xff]
    %v336 = vld [vmem:[#allocation5 + $0x628] sm:$0xff]
    %v337 = vld [vmem:[#allocation5 + $0x630] sm:$0xff]
    %v338 = vld [vmem:[#allocation5 + $0x638] sm:$0xff]
    %v339 = vld [vmem:[#allocation5 + $0x640] sm:$0xff]
    %v340 = vld [vmem:[#allocation5 + $0x648] sm:$0xff]
    %v341 = vld [vmem:[#allocation5 + $0x650] sm:$0xff]
    %v342 = vld [vmem:[#allocation5 + $0x658] sm:$0xff]
    %v343 = vld [vmem:[#allocation5 + $0x660] sm:$0xff]
    %v344 = vld [vmem:[#allocation5 + $0x668] sm:$0xff]
    %v345 = vld [vmem:[#allocation5 + $0x670] sm:$0xff]
    %v346 = vld [vmem:[#allocation5 + $0x678] sm:$0xff]
    %v347 = vld [vmem:[#allocation5 + $0x680] sm:$0xff]
    %v348 = vld [vmem:[#allocation5 + $0x688] sm:$0xff]
    %v349 = vld [vmem:[#allocation5 + $0x690] sm:$0xff]
    %v350 = vld [vmem:[#allocation5 + $0x698] sm:$0xff]
    %v351 = vld [vmem:[#allocation5 + $0x6a0] sm:$0xff]
    %v352 = vld [vmem:[#allocation5 + $0x6a8] sm:$0xff]
    %v353 = vld [vmem:[#allocation5 + $0x6b0] sm:$0xff]
    %v354 = vld [vmem:[#allocation5 + $0x6b8] sm:$0xff]
    %v355 = vld [vmem:[#allocation5 + $0x6c0] sm:$0xff]
    %v356 = vld [vmem:[#allocation5 + $0x6c8] sm:$0xff]
    %v357 = vld [vmem:[#allocation5 + $0x6d0] sm:$0xff]
    %v358 = vld [vmem:[#allocation5 + $0x6d8] sm:$0xff]
    %v359 = vld [vmem:[#allocation5 + $0x6e0] sm:$0xff]
    %v360 = vld [vmem:[#allocation5 + $0x6e8] sm:$0xff]
    %v361 = vld [vmem:[#allocation5 + $0x6f0] sm:$0xff]
    %v362 = vld [vmem:[#allocation5 + $0x6f8] sm:$0xff]
    %v363 = vld [vmem:[#allocation5 + $0x700] sm:$0xff]
    %v364 = vld [vmem:[#allocation5 + $0x708] sm:$0xff]
    %v365 = vld [vmem:[#allocation5 + $0x710] sm:$0xff]
    %v366 = vld [vmem:[#allocation5 + $0x718] sm:$0xff]
    %v367 = vld [vmem:[#allocation5 + $0x720] sm:$0xff]
    %v368 = vld [vmem:[#allocation5 + $0x728] sm:$0xff]
    %v369 = vld [vmem:[#allocation5 + $0x730] sm:$0xff]
    %v370 = vld [vmem:[#allocation5 + $0x738] sm:$0xff]
    %v371 = vld [vmem:[#allocation5 + $0x740] sm:$0xff]
    %v372 = vld [vmem:[#allocation5 + $0x748] sm:$0xff]
    %v373 = vld [vmem:[#allocation5 + $0x750] sm:$0xff]
    %v374 = vld [vmem:[#allocation5 + $0x758] sm:$0xff]
    %v375 = vld [vmem:[#allocation5 + $0x760] sm:$0xff]
    %v376 = vld [vmem:[#allocation5 + $0x768] sm:$0xff]
    %v377 = vld [vmem:[#allocation5 + $0x770] sm:$0xff]
    %v378 = vld [vmem:[#allocation5 + $0x778] sm:$0xff]
    %v379 = vld [vmem:[#allocation5 + $0x780] sm:$0xff]
    %v380 = vld [vmem:[#allocation5 + $0x788] sm:$0xff]
    %v381 = vld [vmem:[#allocation5 + $0x790] sm:$0xff]
    %v382 = vld [vmem:[#allocation5 + $0x798] sm:$0xff]
    %v383 = vld [vmem:[#allocation5 + $0x7a0] sm:$0xff]
    %v384 = vld [vmem:[#allocation5 + $0x7a8] sm:$0xff]
    %v385 = vld [vmem:[#allocation5 + $0x7b0] sm:$0xff]
    %v386 = vld [vmem:[#allocation5 + $0x7b8] sm:$0xff]
    %v387 = vld [vmem:[#allocation5 + $0x7c0] sm:$0xff]
    %v388 = vld [vmem:[#allocation5 + $0x7c8] sm:$0xff]
    %v389 = vld [vmem:[#allocation5 + $0x7d0] sm:$0xff]
    %v390 = vld [vmem:[#allocation5 + $0x7d8] sm:$0xff]
    %v391 = vld [vmem:[#allocation5 + $0x7e0] sm:$0xff]
    %v392 = vld [vmem:[#allocation5 + $0x7e8] sm:$0xff]
    %v393 = vld [vmem:[#allocation5 + $0x7f0] sm:$0xff]
    %v394 = vld [vmem:[#allocation5 + $0x7f8] sm:$0xff]
    %v395 = vld [vmem:[#allocation7] sm:$0xf]
    %v397 = vperm.slane %v395, 0
    %v398 = vperm.slane %v395, 1
    %v399 = vperm.slane %v395, 2
    %v400 = vperm.slane %v395, 3
    %v661 = vunpack.c.l.b16 %v139
    %v662 = vunpack.c.h.b16 %v139
    %v663 = vunpack.c.l.b16 %v140
    %v664 = vunpack.c.h.b16 %v140
    %v665 = vunpack.c.l.b16 %v141
    %v666 = vunpack.c.h.b16 %v141
    %v667 = vunpack.c.l.b16 %v142
    %v668 = vunpack.c.h.b16 %v142
    %v669 = vunpack.c.l.b16 %v143
    %v670 = vunpack.c.h.b16 %v143
    %v671 = vunpack.c.l.b16 %v144
    %v672 = vunpack.c.h.b16 %v144
    %v673 = vunpack.c.l.b16 %v145
    %v674 = vunpack.c.h.b16 %v145
    %v675 = vunpack.c.l.b16 %v146
    %v676 = vunpack.c.h.b16 %v146
    %v677 = vunpack.c.l.b16 %v147
    %v678 = vunpack.c.h.b16 %v147
    %v679 = vunpack.c.l.b16 %v148
    %v680 = vunpack.c.h.b16 %v148
    %v681 = vunpack.c.l.b16 %v149
    %v682 = vunpack.c.h.b16 %v149
    %v683 = vunpack.c.l.b16 %v150
    %v684 = vunpack.c.h.b16 %v150
    %v685 = vunpack.c.l.b16 %v151
    %v686 = vunpack.c.h.b16 %v151
    %v687 = vunpack.c.l.b16 %v152
    %v688 = vunpack.c.h.b16 %v152
    %v689 = vunpack.c.l.b16 %v153
    %v690 = vunpack.c.h.b16 %v153
    %v691 = vunpack.c.l.b16 %v154
    %v692 = vunpack.c.h.b16 %v154
    %v693 = vunpack.c.l.b16 %v155
    %v694 = vunpack.c.h.b16 %v155
    %v695 = vunpack.c.l.b16 %v156
    %v696 = vunpack.c.h.b16 %v156
    %v697 = vunpack.c.l.b16 %v157
    %v698 = vunpack.c.h.b16 %v157
    %v699 = vunpack.c.l.b16 %v158
    %v700 = vunpack.c.h.b16 %v158
    %v701 = vunpack.c.l.b16 %v159
    %v702 = vunpack.c.h.b16 %v159
    %v703 = vunpack.c.l.b16 %v160
    %v704 = vunpack.c.h.b16 %v160
    %v705 = vunpack.c.l.b16 %v161
    %v706 = vunpack.c.h.b16 %v161
    %v707 = vunpack.c.l.b16 %v162
    %v708 = vunpack.c.h.b16 %v162
    %v709 = vunpack.c.l.b16 %v163
    %v710 = vunpack.c.h.b16 %v163
    %v711 = vunpack.c.l.b16 %v164
    %v712 = vunpack.c.h.b16 %v164
    %v713 = vunpack.c.l.b16 %v165
    %v714 = vunpack.c.h.b16 %v165
    %v715 = vunpack.c.l.b16 %v166
    %v716 = vunpack.c.h.b16 %v166
    %v717 = vunpack.c.l.b16 %v167
    %v718 = vunpack.c.h.b16 %v167
    %v719 = vunpack.c.l.b16 %v168
    %v720 = vunpack.c.h.b16 %v168
    %v721 = vunpack.c.l.b16 %v169
    %v722 = vunpack.c.h.b16 %v169
    %v723 = vunpack.c.l.b16 %v170
    %v724 = vunpack.c.h.b16 %v170
    %v725 = vunpack.c.l.b16 %v171
    %v726 = vunpack.c.h.b16 %v171
    %v727 = vunpack.c.l.b16 %v172
    %v728 = vunpack.c.h.b16 %v172
    %v729 = vunpack.c.l.b16 %v173
    %v730 = vunpack.c.h.b16 %v173
    %v731 = vunpack.c.l.b16 %v174
    %v732 = vunpack.c.h.b16 %v174
    %v733 = vunpack.c.l.b16 %v175
    %v734 = vunpack.c.h.b16 %v175
    %v735 = vunpack.c.l.b16 %v176
    %v736 = vunpack.c.h.b16 %v176
    %v737 = vunpack.c.l.b16 %v177
    %v738 = vunpack.c.h.b16 %v177
    %v739 = vunpack.c.l.b16 %v178
    %v740 = vunpack.c.h.b16 %v178
    %v741 = vunpack.c.l.b16 %v179
    %v742 = vunpack.c.h.b16 %v179
    %v743 = vunpack.c.l.b16 %v180
    %v744 = vunpack.c.h.b16 %v180
    %v745 = vunpack.c.l.b16 %v181
    %v746 = vunpack.c.h.b16 %v181
    %v747 = vunpack.c.l.b16 %v182
    %v748 = vunpack.c.h.b16 %v182
    %v749 = vunpack.c.l.b16 %v183
    %v750 = vunpack.c.h.b16 %v183
    %v751 = vunpack.c.l.b16 %v184
    %v752 = vunpack.c.h.b16 %v184
    %v753 = vunpack.c.l.b16 %v185
    %v754 = vunpack.c.h.b16 %v185
    %v755 = vunpack.c.l.b16 %v186
    %v756 = vunpack.c.h.b16 %v186
    %v757 = vunpack.c.l.b16 %v187
    %v758 = vunpack.c.h.b16 %v187
    %v759 = vunpack.c.l.b16 %v188
    %v760 = vunpack.c.h.b16 %v188
    %v761 = vunpack.c.l.b16 %v189
    %v762 = vunpack.c.h.b16 %v189
    %v763 = vunpack.c.l.b16 %v190
    %v764 = vunpack.c.h.b16 %v190
    %v765 = vunpack.c.l.b16 %v191
    %v766 = vunpack.c.h.b16 %v191
    %v767 = vunpack.c.l.b16 %v192
    %v768 = vunpack.c.h.b16 %v192
    %v769 = vunpack.c.l.b16 %v193
    %v770 = vunpack.c.h.b16 %v193
    %v771 = vunpack.c.l.b16 %v194
    %v772 = vunpack.c.h.b16 %v194
    %v773 = vunpack.c.l.b16 %v195
    %v774 = vunpack.c.h.b16 %v195
    %v775 = vunpack.c.l.b16 %v196
    %v776 = vunpack.c.h.b16 %v196
    %v777 = vunpack.c.l.b16 %v197
    %v778 = vunpack.c.h.b16 %v197
    %v779 = vunpack.c.l.b16 %v198
    %v780 = vunpack.c.h.b16 %v198
    %v781 = vunpack.c.l.b16 %v199
    %v782 = vunpack.c.h.b16 %v199
    %v783 = vunpack.c.l.b16 %v200
    %v784 = vunpack.c.h.b16 %v200
    %v785 = vunpack.c.l.b16 %v201
    %v786 = vunpack.c.h.b16 %v201
    %v787 = vunpack.c.l.b16 %v202
    %v788 = vunpack.c.h.b16 %v202
    %v789 = vunpack.c.l.b16 %v203
    %v790 = vunpack.c.h.b16 %v203
    %v791 = vunpack.c.l.b16 %v204
    %v792 = vunpack.c.h.b16 %v204
    %v793 = vunpack.c.l.b16 %v205
    %v794 = vunpack.c.h.b16 %v205
    %v795 = vunpack.c.l.b16 %v206
    %v796 = vunpack.c.h.b16 %v206
    %v797 = vunpack.c.l.b16 %v207
    %v798 = vunpack.c.h.b16 %v207
    %v799 = vunpack.c.l.b16 %v208
    %v800 = vunpack.c.h.b16 %v208
    %v801 = vunpack.c.l.b16 %v209
    %v802 = vunpack.c.h.b16 %v209
    %v803 = vunpack.c.l.b16 %v210
    %v804 = vunpack.c.h.b16 %v210
    %v805 = vunpack.c.l.b16 %v211
    %v806 = vunpack.c.h.b16 %v211
    %v807 = vunpack.c.l.b16 %v212
    %v808 = vunpack.c.h.b16 %v212
    %v809 = vunpack.c.l.b16 %v213
    %v810 = vunpack.c.h.b16 %v213
    %v811 = vunpack.c.l.b16 %v214
    %v812 = vunpack.c.h.b16 %v214
    %v813 = vunpack.c.l.b16 %v215
    %v814 = vunpack.c.h.b16 %v215
    %v815 = vunpack.c.l.b16 %v216
    %v816 = vunpack.c.h.b16 %v216
    %v817 = vunpack.c.l.b16 %v217
    %v818 = vunpack.c.h.b16 %v217
    %v819 = vunpack.c.l.b16 %v218
    %v820 = vunpack.c.h.b16 %v218
    %v821 = vunpack.c.l.b16 %v219
    %v822 = vunpack.c.h.b16 %v219
    %v823 = vunpack.c.l.b16 %v220
    %v824 = vunpack.c.h.b16 %v220
    %v825 = vunpack.c.l.b16 %v221
    %v826 = vunpack.c.h.b16 %v221
    %v827 = vunpack.c.l.b16 %v222
    %v828 = vunpack.c.h.b16 %v222
    %v829 = vunpack.c.l.b16 %v223
    %v830 = vunpack.c.h.b16 %v223
    %v831 = vunpack.c.l.b16 %v224
    %v832 = vunpack.c.h.b16 %v224
    %v833 = vunpack.c.l.b16 %v225
    %v834 = vunpack.c.h.b16 %v225
    %v835 = vunpack.c.l.b16 %v226
    %v836 = vunpack.c.h.b16 %v226
    %v837 = vunpack.c.l.b16 %v227
    %v838 = vunpack.c.h.b16 %v227
    %v839 = vunpack.c.l.b16 %v228
    %v840 = vunpack.c.h.b16 %v228
    %v841 = vunpack.c.l.b16 %v229
    %v842 = vunpack.c.h.b16 %v229
    %v843 = vunpack.c.l.b16 %v230
    %v844 = vunpack.c.h.b16 %v230
    %v845 = vunpack.c.l.b16 %v231
    %v846 = vunpack.c.h.b16 %v231
    %v847 = vunpack.c.l.b16 %v232
    %v848 = vunpack.c.h.b16 %v232
    %v849 = vunpack.c.l.b16 %v233
    %v850 = vunpack.c.h.b16 %v233
    %v851 = vunpack.c.l.b16 %v234
    %v852 = vunpack.c.h.b16 %v234
    %v853 = vunpack.c.l.b16 %v235
    %v854 = vunpack.c.h.b16 %v235
    %v855 = vunpack.c.l.b16 %v236
    %v856 = vunpack.c.h.b16 %v236
    %v857 = vunpack.c.l.b16 %v237
    %v858 = vunpack.c.h.b16 %v237
    %v859 = vunpack.c.l.b16 %v238
    %v860 = vunpack.c.h.b16 %v238
    %v861 = vunpack.c.l.b16 %v239
    %v862 = vunpack.c.h.b16 %v239
    %v863 = vunpack.c.l.b16 %v240
    %v864 = vunpack.c.h.b16 %v240
    %v865 = vunpack.c.l.b16 %v241
    %v866 = vunpack.c.h.b16 %v241
    %v867 = vunpack.c.l.b16 %v242
    %v868 = vunpack.c.h.b16 %v242
    %v869 = vunpack.c.l.b16 %v243
    %v870 = vunpack.c.h.b16 %v243
    %v871 = vunpack.c.l.b16 %v244
    %v872 = vunpack.c.h.b16 %v244
    %v873 = vunpack.c.l.b16 %v245
    %v874 = vunpack.c.h.b16 %v245
    %v875 = vunpack.c.l.b16 %v246
    %v876 = vunpack.c.h.b16 %v246
    %v877 = vunpack.c.l.b16 %v247
    %v878 = vunpack.c.h.b16 %v247
    %v879 = vunpack.c.l.b16 %v248
    %v880 = vunpack.c.h.b16 %v248
    %v881 = vunpack.c.l.b16 %v249
    %v882 = vunpack.c.h.b16 %v249
    %v883 = vunpack.c.l.b16 %v250
    %v884 = vunpack.c.h.b16 %v250
    %v885 = vunpack.c.l.b16 %v251
    %v886 = vunpack.c.h.b16 %v251
    %v887 = vunpack.c.l.b16 %v252
    %v888 = vunpack.c.h.b16 %v252
    %v889 = vunpack.c.l.b16 %v253
    %v890 = vunpack.c.h.b16 %v253
    %v891 = vunpack.c.l.b16 %v254
    %v892 = vunpack.c.h.b16 %v254
    %v893 = vunpack.c.l.b16 %v255
    %v894 = vunpack.c.h.b16 %v255
    %v895 = vunpack.c.l.b16 %v256
    %v896 = vunpack.c.h.b16 %v256
    %v897 = vunpack.c.l.b16 %v257
    %v898 = vunpack.c.h.b16 %v257
    %v899 = vunpack.c.l.b16 %v258
    %v900 = vunpack.c.h.b16 %v258
    %v901 = vunpack.c.l.b16 %v259
    %v902 = vunpack.c.h.b16 %v259
    %v903 = vunpack.c.l.b16 %v260
    %v904 = vunpack.c.h.b16 %v260
    %v905 = vunpack.c.l.b16 %v261
    %v906 = vunpack.c.h.b16 %v261
    %v907 = vunpack.c.l.b16 %v262
    %v908 = vunpack.c.h.b16 %v262
    %v909 = vunpack.c.l.b16 %v263
    %v910 = vunpack.c.h.b16 %v263
    %v911 = vunpack.c.l.b16 %v264
    %v912 = vunpack.c.h.b16 %v264
    %v913 = vunpack.c.l.b16 %v265
    %v914 = vunpack.c.h.b16 %v265
    %v915 = vunpack.c.l.b16 %v266
    %v916 = vunpack.c.h.b16 %v266
    %v917 = vunpack.c.l.b16 %v267
    %v918 = vunpack.c.h.b16 %v267
    %v919 = vunpack.c.l.b16 %v268
    %v920 = vunpack.c.h.b16 %v268
    %v921 = vunpack.c.l.b16 %v269
    %v922 = vunpack.c.h.b16 %v269
    %v923 = vunpack.c.l.b16 %v270
    %v924 = vunpack.c.h.b16 %v270
    %v925 = vunpack.c.l.b16 %v271
    %v926 = vunpack.c.h.b16 %v271
    %v927 = vunpack.c.l.b16 %v272
    %v928 = vunpack.c.h.b16 %v272
    %v929 = vunpack.c.l.b16 %v273
    %v930 = vunpack.c.h.b16 %v273
    %v931 = vunpack.c.l.b16 %v274
    %v932 = vunpack.c.h.b16 %v274
    %v933 = vunpack.c.l.b16 %v275
    %v934 = vunpack.c.h.b16 %v275
    %v935 = vunpack.c.l.b16 %v276
    %v936 = vunpack.c.h.b16 %v276
    %v937 = vunpack.c.l.b16 %v277
    %v938 = vunpack.c.h.b16 %v277
    %v939 = vunpack.c.l.b16 %v278
    %v940 = vunpack.c.h.b16 %v278
    %v941 = vunpack.c.l.b16 %v279
    %v942 = vunpack.c.h.b16 %v279
    %v943 = vunpack.c.l.b16 %v280
    %v944 = vunpack.c.h.b16 %v280
    %v945 = vunpack.c.l.b16 %v281
    %v946 = vunpack.c.h.b16 %v281
    %v947 = vunpack.c.l.b16 %v282
    %v948 = vunpack.c.h.b16 %v282
    %v949 = vunpack.c.l.b16 %v283
    %v950 = vunpack.c.h.b16 %v283
    %v951 = vunpack.c.l.b16 %v284
    %v952 = vunpack.c.h.b16 %v284
    %v953 = vunpack.c.l.b16 %v285
    %v954 = vunpack.c.h.b16 %v285
    %v955 = vunpack.c.l.b16 %v286
    %v956 = vunpack.c.h.b16 %v286
    %v957 = vunpack.c.l.b16 %v287
    %v958 = vunpack.c.h.b16 %v287
    %v959 = vunpack.c.l.b16 %v288
    %v960 = vunpack.c.h.b16 %v288
    %v961 = vunpack.c.l.b16 %v289
    %v962 = vunpack.c.h.b16 %v289
    %v963 = vunpack.c.l.b16 %v290
    %v964 = vunpack.c.h.b16 %v290
    %v965 = vunpack.c.l.b16 %v291
    %v966 = vunpack.c.h.b16 %v291
    %v967 = vunpack.c.l.b16 %v292
    %v968 = vunpack.c.h.b16 %v292
    %v969 = vunpack.c.l.b16 %v293
    %v970 = vunpack.c.h.b16 %v293
    %v971 = vunpack.c.l.b16 %v294
    %v972 = vunpack.c.h.b16 %v294
    %v973 = vunpack.c.l.b16 %v295
    %v974 = vunpack.c.h.b16 %v295
    %v975 = vunpack.c.l.b16 %v296
    %v976 = vunpack.c.h.b16 %v296
    %v977 = vunpack.c.l.b16 %v297
    %v978 = vunpack.c.h.b16 %v297
    %v979 = vunpack.c.l.b16 %v298
    %v980 = vunpack.c.h.b16 %v298
    %v981 = vunpack.c.l.b16 %v299
    %v982 = vunpack.c.h.b16 %v299
    %v983 = vunpack.c.l.b16 %v300
    %v984 = vunpack.c.h.b16 %v300
    %v985 = vunpack.c.l.b16 %v301
    %v986 = vunpack.c.h.b16 %v301
    %v987 = vunpack.c.l.b16 %v302
    %v988 = vunpack.c.h.b16 %v302
    %v989 = vunpack.c.l.b16 %v303
    %v990 = vunpack.c.h.b16 %v303
    %v991 = vunpack.c.l.b16 %v304
    %v992 = vunpack.c.h.b16 %v304
    %v993 = vunpack.c.l.b16 %v305
    %v994 = vunpack.c.h.b16 %v305
    %v995 = vunpack.c.l.b16 %v306
    %v996 = vunpack.c.h.b16 %v306
    %v997 = vunpack.c.l.b16 %v307
    %v998 = vunpack.c.h.b16 %v307
    %v999 = vunpack.c.l.b16 %v308
    %v1000 = vunpack.c.h.b16 %v308
    %v1001 = vunpack.c.l.b16 %v309
    %v1002 = vunpack.c.h.b16 %v309
    %v1003 = vunpack.c.l.b16 %v310
    %v1004 = vunpack.c.h.b16 %v310
    %v1005 = vunpack.c.l.b16 %v311
    %v1006 = vunpack.c.h.b16 %v311
    %v1007 = vunpack.c.l.b16 %v312
    %v1008 = vunpack.c.h.b16 %v312
    %v1009 = vunpack.c.l.b16 %v313
    %v1010 = vunpack.c.h.b16 %v313
    %v1011 = vunpack.c.l.b16 %v314
    %v1012 = vunpack.c.h.b16 %v314
    %v1013 = vunpack.c.l.b16 %v315
    %v1014 = vunpack.c.h.b16 %v315
    %v1015 = vunpack.c.l.b16 %v316
    %v1016 = vunpack.c.h.b16 %v316
    %v1017 = vunpack.c.l.b16 %v317
    %v1018 = vunpack.c.h.b16 %v317
    %v1019 = vunpack.c.l.b16 %v318
    %v1020 = vunpack.c.h.b16 %v318
    %v1021 = vunpack.c.l.b16 %v319
    %v1022 = vunpack.c.h.b16 %v319
    %v1023 = vunpack.c.l.b16 %v320
    %v1024 = vunpack.c.h.b16 %v320
    %v1025 = vunpack.c.l.b16 %v321
    %v1026 = vunpack.c.h.b16 %v321
    %v1027 = vunpack.c.l.b16 %v322
    %v1028 = vunpack.c.h.b16 %v322
    %v1029 = vunpack.c.l.b16 %v323
    %v1030 = vunpack.c.h.b16 %v323
    %v1031 = vunpack.c.l.b16 %v324
    %v1032 = vunpack.c.h.b16 %v324
    %v1033 = vunpack.c.l.b16 %v325
    %v1034 = vunpack.c.h.b16 %v325
    %v1035 = vunpack.c.l.b16 %v326
    %v1036 = vunpack.c.h.b16 %v326
    %v1037 = vunpack.c.l.b16 %v327
    %v1038 = vunpack.c.h.b16 %v327
    %v1039 = vunpack.c.l.b16 %v328
    %v1040 = vunpack.c.h.b16 %v328
    %v1041 = vunpack.c.l.b16 %v329
    %v1042 = vunpack.c.h.b16 %v329
    %v1043 = vunpack.c.l.b16 %v330
    %v1044 = vunpack.c.h.b16 %v330
    %v1045 = vunpack.c.l.b16 %v331
    %v1046 = vunpack.c.h.b16 %v331
    %v1047 = vunpack.c.l.b16 %v332
    %v1048 = vunpack.c.h.b16 %v332
    %v1049 = vunpack.c.l.b16 %v333
    %v1050 = vunpack.c.h.b16 %v333
    %v1051 = vunpack.c.l.b16 %v334
    %v1052 = vunpack.c.h.b16 %v334
    %v1053 = vunpack.c.l.b16 %v335
    %v1054 = vunpack.c.h.b16 %v335
    %v1055 = vunpack.c.l.b16 %v336
    %v1056 = vunpack.c.h.b16 %v336
    %v1057 = vunpack.c.l.b16 %v337
    %v1058 = vunpack.c.h.b16 %v337
    %v1059 = vunpack.c.l.b16 %v338
    %v1060 = vunpack.c.h.b16 %v338
    %v1061 = vunpack.c.l.b16 %v339
    %v1062 = vunpack.c.h.b16 %v339
    %v1063 = vunpack.c.l.b16 %v340
    %v1064 = vunpack.c.h.b16 %v340
    %v1065 = vunpack.c.l.b16 %v341
    %v1066 = vunpack.c.h.b16 %v341
    %v1067 = vunpack.c.l.b16 %v342
    %v1068 = vunpack.c.h.b16 %v342
    %v1069 = vunpack.c.l.b16 %v343
    %v1070 = vunpack.c.h.b16 %v343
    %v1071 = vunpack.c.l.b16 %v344
    %v1072 = vunpack.c.h.b16 %v344
    %v1073 = vunpack.c.l.b16 %v345
    %v1074 = vunpack.c.h.b16 %v345
    %v1075 = vunpack.c.l.b16 %v346
    %v1076 = vunpack.c.h.b16 %v346
    %v1077 = vunpack.c.l.b16 %v347
    %v1078 = vunpack.c.h.b16 %v347
    %v1079 = vunpack.c.l.b16 %v348
    %v1080 = vunpack.c.h.b16 %v348
    %v1081 = vunpack.c.l.b16 %v349
    %v1082 = vunpack.c.h.b16 %v349
    %v1083 = vunpack.c.l.b16 %v350
    %v1084 = vunpack.c.h.b16 %v350
    %v1085 = vunpack.c.l.b16 %v351
    %v1086 = vunpack.c.h.b16 %v351
    %v1087 = vunpack.c.l.b16 %v352
    %v1088 = vunpack.c.h.b16 %v352
    %v1089 = vunpack.c.l.b16 %v353
    %v1090 = vunpack.c.h.b16 %v353
    %v1091 = vunpack.c.l.b16 %v354
    %v1092 = vunpack.c.h.b16 %v354
    %v1093 = vunpack.c.l.b16 %v355
    %v1094 = vunpack.c.h.b16 %v355
    %v1095 = vunpack.c.l.b16 %v356
    %v1096 = vunpack.c.h.b16 %v356
    %v1097 = vunpack.c.l.b16 %v357
    %v1098 = vunpack.c.h.b16 %v357
    %v1099 = vunpack.c.l.b16 %v358
    %v1100 = vunpack.c.h.b16 %v358
    %v1101 = vunpack.c.l.b16 %v359
    %v1102 = vunpack.c.h.b16 %v359
    %v1103 = vunpack.c.l.b16 %v360
    %v1104 = vunpack.c.h.b16 %v360
    %v1105 = vunpack.c.l.b16 %v361
    %v1106 = vunpack.c.h.b16 %v361
    %v1107 = vunpack.c.l.b16 %v362
    %v1108 = vunpack.c.h.b16 %v362
    %v1109 = vunpack.c.l.b16 %v363
    %v1110 = vunpack.c.h.b16 %v363
    %v1111 = vunpack.c.l.b16 %v364
    %v1112 = vunpack.c.h.b16 %v364
    %v1113 = vunpack.c.l.b16 %v365
    %v1114 = vunpack.c.h.b16 %v365
    %v1115 = vunpack.c.l.b16 %v366
    %v1116 = vunpack.c.h.b16 %v366
    %v1117 = vunpack.c.l.b16 %v367
    %v1118 = vunpack.c.h.b16 %v367
    %v1119 = vunpack.c.l.b16 %v368
    %v1120 = vunpack.c.h.b16 %v368
    %v1121 = vunpack.c.l.b16 %v369
    %v1122 = vunpack.c.h.b16 %v369
    %v1123 = vunpack.c.l.b16 %v370
    %v1124 = vunpack.c.h.b16 %v370
    %v1125 = vunpack.c.l.b16 %v371
    %v1126 = vunpack.c.h.b16 %v371
    %v1127 = vunpack.c.l.b16 %v372
    %v1128 = vunpack.c.h.b16 %v372
    %v1129 = vunpack.c.l.b16 %v373
    %v1130 = vunpack.c.h.b16 %v373
    %v1131 = vunpack.c.l.b16 %v374
    %v1132 = vunpack.c.h.b16 %v374
    %v1133 = vunpack.c.l.b16 %v375
    %v1134 = vunpack.c.h.b16 %v375
    %v1135 = vunpack.c.l.b16 %v376
    %v1136 = vunpack.c.h.b16 %v376
    %v1137 = vunpack.c.l.b16 %v377
    %v1138 = vunpack.c.h.b16 %v377
    %v1139 = vunpack.c.l.b16 %v378
    %v1140 = vunpack.c.h.b16 %v378
    %v1141 = vunpack.c.l.b16 %v379
    %v1142 = vunpack.c.h.b16 %v379
    %v1143 = vunpack.c.l.b16 %v380
    %v1144 = vunpack.c.h.b16 %v380
    %v1145 = vunpack.c.l.b16 %v381
    %v1146 = vunpack.c.h.b16 %v381
    %v1147 = vunpack.c.l.b16 %v382
    %v1148 = vunpack.c.h.b16 %v382
    %v1149 = vunpack.c.l.b16 %v383
    %v1150 = vunpack.c.h.b16 %v383
    %v1151 = vunpack.c.l.b16 %v384
    %v1152 = vunpack.c.h.b16 %v384
    %v1153 = vunpack.c.l.b16 %v385
    %v1154 = vunpack.c.h.b16 %v385
    %v1155 = vunpack.c.l.b16 %v386
    %v1156 = vunpack.c.h.b16 %v386
    %v1157 = vunpack.c.l.b16 %v387
    %v1158 = vunpack.c.h.b16 %v387
    %v1159 = vunpack.c.l.b16 %v388
    %v1160 = vunpack.c.h.b16 %v388
    %v1161 = vunpack.c.l.b16 %v389
    %v1162 = vunpack.c.h.b16 %v389
    %v1163 = vunpack.c.l.b16 %v390
    %v1164 = vunpack.c.h.b16 %v390
    %v1165 = vunpack.c.l.b16 %v391
    %v1166 = vunpack.c.h.b16 %v391
    %v1167 = vunpack.c.l.b16 %v392
    %v1168 = vunpack.c.h.b16 %v392
    %v1169 = vunpack.c.l.b16 %v393
    %v1170 = vunpack.c.h.b16 %v393
    %v1171 = vunpack.c.l.b16 %v394
    %v1172 = vunpack.c.h.b16 %v394
    %v1173 = vpack.c.b16 %v665, %v661
    %v1174 = vpack.c.b16 %v666, %v662
    %v1175 = vpack.c.b16 %v667, %v663
    %v1176 = vpack.c.b16 %v668, %v664
    %v1177 = vpack.c.b16 %v673, %v669
    %v1178 = vpack.c.b16 %v674, %v670
    %v1179 = vpack.c.b16 %v675, %v671
    %v1180 = vpack.c.b16 %v676, %v672
    %v1181 = vpack.c.b16 %v681, %v677
    %v1182 = vpack.c.b16 %v682, %v678
    %v1183 = vpack.c.b16 %v683, %v679
    %v1184 = vpack.c.b16 %v684, %v680
    %v1185 = vpack.c.b16 %v689, %v685
    %v1186 = vpack.c.b16 %v690, %v686
    %v1187 = vpack.c.b16 %v691, %v687
    %v1188 = vpack.c.b16 %v692, %v688
    %v1189 = vpack.c.b16 %v697, %v693
    %v1190 = vpack.c.b16 %v698, %v694
    %v1191 = vpack.c.b16 %v699, %v695
    %v1192 = vpack.c.b16 %v700, %v696
    %v1193 = vpack.c.b16 %v705, %v701
    %v1194 = vpack.c.b16 %v706, %v702
    %v1195 = vpack.c.b16 %v707, %v703
    %v1196 = vpack.c.b16 %v708, %v704
    %v1197 = vpack.c.b16 %v713, %v709
    %v1198 = vpack.c.b16 %v714, %v710
    %v1199 = vpack.c.b16 %v715, %v711
    %v1200 = vpack.c.b16 %v716, %v712
    %v1201 = vpack.c.b16 %v721, %v717
    %v1202 = vpack.c.b16 %v722, %v718
    %v1203 = vpack.c.b16 %v723, %v719
    %v1204 = vpack.c.b16 %v724, %v720
    %v1205 = vpack.c.b16 %v729, %v725
    %v1206 = vpack.c.b16 %v730, %v726
    %v1207 = vpack.c.b16 %v731, %v727
    %v1208 = vpack.c.b16 %v732, %v728
    %v1209 = vpack.c.b16 %v737, %v733
    %v1210 = vpack.c.b16 %v738, %v734
    %v1211 = vpack.c.b16 %v739, %v735
    %v1212 = vpack.c.b16 %v740, %v736
    %v1213 = vpack.c.b16 %v745, %v741
    %v1214 = vpack.c.b16 %v746, %v742
    %v1215 = vpack.c.b16 %v747, %v743
    %v1216 = vpack.c.b16 %v748, %v744
    %v1217 = vpack.c.b16 %v753, %v749
    %v1218 = vpack.c.b16 %v754, %v750
    %v1219 = vpack.c.b16 %v755, %v751
    %v1220 = vpack.c.b16 %v756, %v752
    %v1221 = vpack.c.b16 %v761, %v757
    %v1222 = vpack.c.b16 %v762, %v758
    %v1223 = vpack.c.b16 %v763, %v759
    %v1224 = vpack.c.b16 %v764, %v760
    %v1225 = vpack.c.b16 %v769, %v765
    %v1226 = vpack.c.b16 %v770, %v766
    %v1227 = vpack.c.b16 %v771, %v767
    %v1228 = vpack.c.b16 %v772, %v768
    %v1229 = vpack.c.b16 %v777, %v773
    %v1230 = vpack.c.b16 %v778, %v774
    %v1231 = vpack.c.b16 %v779, %v775
    %v1232 = vpack.c.b16 %v780, %v776
    %v1233 = vpack.c.b16 %v785, %v781
    %v1234 = vpack.c.b16 %v786, %v782
    %v1235 = vpack.c.b16 %v787, %v783
    %v1236 = vpack.c.b16 %v788, %v784
    %v1237 = vpack.c.b16 %v793, %v789
    %v1238 = vpack.c.b16 %v794, %v790
    %v1239 = vpack.c.b16 %v795, %v791
    %v1240 = vpack.c.b16 %v796, %v792
    %v1241 = vpack.c.b16 %v801, %v797
    %v1242 = vpack.c.b16 %v802, %v798
    %v1243 = vpack.c.b16 %v803, %v799
    %v1244 = vpack.c.b16 %v804, %v800
    %v1245 = vpack.c.b16 %v809, %v805
    %v1246 = vpack.c.b16 %v810, %v806
    %v1247 = vpack.c.b16 %v811, %v807
    %v1248 = vpack.c.b16 %v812, %v808
    %v1249 = vpack.c.b16 %v817, %v813
    %v1250 = vpack.c.b16 %v818, %v814
    %v1251 = vpack.c.b16 %v819, %v815
    %v1252 = vpack.c.b16 %v820, %v816
    %v1253 = vpack.c.b16 %v825, %v821
    %v1254 = vpack.c.b16 %v826, %v822
    %v1255 = vpack.c.b16 %v827, %v823
    %v1256 = vpack.c.b16 %v828, %v824
    %v1257 = vpack.c.b16 %v833, %v829
    %v1258 = vpack.c.b16 %v834, %v830
    %v1259 = vpack.c.b16 %v835, %v831
    %v1260 = vpack.c.b16 %v836, %v832
    %v1261 = vpack.c.b16 %v841, %v837
    %v1262 = vpack.c.b16 %v842, %v838
    %v1263 = vpack.c.b16 %v843, %v839
    %v1264 = vpack.c.b16 %v844, %v840
    %v1265 = vpack.c.b16 %v849, %v845
    %v1266 = vpack.c.b16 %v850, %v846
    %v1267 = vpack.c.b16 %v851, %v847
    %v1268 = vpack.c.b16 %v852, %v848
    %v1269 = vpack.c.b16 %v857, %v853
    %v1270 = vpack.c.b16 %v858, %v854
    %v1271 = vpack.c.b16 %v859, %v855
    %v1272 = vpack.c.b16 %v860, %v856
    %v1273 = vpack.c.b16 %v865, %v861
    %v1274 = vpack.c.b16 %v866, %v862
    %v1275 = vpack.c.b16 %v867, %v863
    %v1276 = vpack.c.b16 %v868, %v864
    %v1277 = vpack.c.b16 %v873, %v869
    %v1278 = vpack.c.b16 %v874, %v870
    %v1279 = vpack.c.b16 %v875, %v871
    %v1280 = vpack.c.b16 %v876, %v872
    %v1281 = vpack.c.b16 %v881, %v877
    %v1282 = vpack.c.b16 %v882, %v878
    %v1283 = vpack.c.b16 %v883, %v879
    %v1284 = vpack.c.b16 %v884, %v880
    %v1285 = vpack.c.b16 %v889, %v885
    %v1286 = vpack.c.b16 %v890, %v886
    %v1287 = vpack.c.b16 %v891, %v887
    %v1288 = vpack.c.b16 %v892, %v888
    %v1289 = vpack.c.b16 %v897, %v893
    %v1290 = vpack.c.b16 %v898, %v894
    %v1291 = vpack.c.b16 %v899, %v895
    %v1292 = vpack.c.b16 %v900, %v896
    %v1293 = vpack.c.b16 %v905, %v901
    %v1294 = vpack.c.b16 %v906, %v902
    %v1295 = vpack.c.b16 %v907, %v903
    %v1296 = vpack.c.b16 %v908, %v904
    %v1297 = vpack.c.b16 %v913, %v909
    %v1298 = vpack.c.b16 %v914, %v910
    %v1299 = vpack.c.b16 %v915, %v911
    %v1300 = vpack.c.b16 %v916, %v912
    %v1301 = vpack.c.b16 %v921, %v917
    %v1302 = vpack.c.b16 %v922, %v918
    %v1303 = vpack.c.b16 %v923, %v919
    %v1304 = vpack.c.b16 %v924, %v920
    %v1305 = vpack.c.b16 %v929, %v925
    %v1306 = vpack.c.b16 %v930, %v926
    %v1307 = vpack.c.b16 %v931, %v927
    %v1308 = vpack.c.b16 %v932, %v928
    %v1309 = vpack.c.b16 %v937, %v933
    %v1310 = vpack.c.b16 %v938, %v934
    %v1311 = vpack.c.b16 %v939, %v935
    %v1312 = vpack.c.b16 %v940, %v936
    %v1313 = vpack.c.b16 %v945, %v941
    %v1314 = vpack.c.b16 %v946, %v942
    %v1315 = vpack.c.b16 %v947, %v943
    %v1316 = vpack.c.b16 %v948, %v944
    %v1317 = vpack.c.b16 %v953, %v949
    %v1318 = vpack.c.b16 %v954, %v950
    %v1319 = vpack.c.b16 %v955, %v951
    %v1320 = vpack.c.b16 %v956, %v952
    %v1321 = vpack.c.b16 %v961, %v957
    %v1322 = vpack.c.b16 %v962, %v958
    %v1323 = vpack.c.b16 %v963, %v959
    %v1324 = vpack.c.b16 %v964, %v960
    %v1325 = vpack.c.b16 %v969, %v965
    %v1326 = vpack.c.b16 %v970, %v966
    %v1327 = vpack.c.b16 %v971, %v967
    %v1328 = vpack.c.b16 %v972, %v968
    %v1329 = vpack.c.b16 %v977, %v973
    %v1330 = vpack.c.b16 %v978, %v974
    %v1331 = vpack.c.b16 %v979, %v975
    %v1332 = vpack.c.b16 %v980, %v976
    %v1333 = vpack.c.b16 %v985, %v981
    %v1334 = vpack.c.b16 %v986, %v982
    %v1335 = vpack.c.b16 %v987, %v983
    %v1336 = vpack.c.b16 %v988, %v984
    %v1337 = vpack.c.b16 %v993, %v989
    %v1338 = vpack.c.b16 %v994, %v990
    %v1339 = vpack.c.b16 %v995, %v991
    %v1340 = vpack.c.b16 %v996, %v992
    %v1341 = vpack.c.b16 %v1001, %v997
    %v1342 = vpack.c.b16 %v1002, %v998
    %v1343 = vpack.c.b16 %v1003, %v999
    %v1344 = vpack.c.b16 %v1004, %v1000
    %v1345 = vpack.c.b16 %v1009, %v1005
    %v1346 = vpack.c.b16 %v1010, %v1006
    %v1347 = vpack.c.b16 %v1011, %v1007
    %v1348 = vpack.c.b16 %v1012, %v1008
    %v1349 = vpack.c.b16 %v1017, %v1013
    %v1350 = vpack.c.b16 %v1018, %v1014
    %v1351 = vpack.c.b16 %v1019, %v1015
    %v1352 = vpack.c.b16 %v1020, %v1016
    %v1353 = vpack.c.b16 %v1025, %v1021
    %v1354 = vpack.c.b16 %v1026, %v1022
    %v1355 = vpack.c.b16 %v1027, %v1023
    %v1356 = vpack.c.b16 %v1028, %v1024
    %v1357 = vpack.c.b16 %v1033, %v1029
    %v1358 = vpack.c.b16 %v1034, %v1030
    %v1359 = vpack.c.b16 %v1035, %v1031
    %v1360 = vpack.c.b16 %v1036, %v1032
    %v1361 = vpack.c.b16 %v1041, %v1037
    %v1362 = vpack.c.b16 %v1042, %v1038
    %v1363 = vpack.c.b16 %v1043, %v1039
    %v1364 = vpack.c.b16 %v1044, %v1040
    %v1365 = vpack.c.b16 %v1049, %v1045
    %v1366 = vpack.c.b16 %v1050, %v1046
    %v1367 = vpack.c.b16 %v1051, %v1047
    %v1368 = vpack.c.b16 %v1052, %v1048
    %v1369 = vpack.c.b16 %v1057, %v1053
    %v1370 = vpack.c.b16 %v1058, %v1054
    %v1371 = vpack.c.b16 %v1059, %v1055
    %v1372 = vpack.c.b16 %v1060, %v1056
    %v1373 = vpack.c.b16 %v1065, %v1061
    %v1374 = vpack.c.b16 %v1066, %v1062
    %v1375 = vpack.c.b16 %v1067, %v1063
    %v1376 = vpack.c.b16 %v1068, %v1064
    %v1377 = vpack.c.b16 %v1073, %v1069
    %v1378 = vpack.c.b16 %v1074, %v1070
    %v1379 = vpack.c.b16 %v1075, %v1071
    %v1380 = vpack.c.b16 %v1076, %v1072
    %v1381 = vpack.c.b16 %v1081, %v1077
    %v1382 = vpack.c.b16 %v1082, %v1078
    %v1383 = vpack.c.b16 %v1083, %v1079
    %v1384 = vpack.c.b16 %v1084, %v1080
    %v1385 = vpack.c.b16 %v1089, %v1085
    %v1386 = vpack.c.b16 %v1090, %v1086
    %v1387 = vpack.c.b16 %v1091, %v1087
    %v1388 = vpack.c.b16 %v1092, %v1088
    %v1389 = vpack.c.b16 %v1097, %v1093
    %v1390 = vpack.c.b16 %v1098, %v1094
    %v1391 = vpack.c.b16 %v1099, %v1095
    %v1392 = vpack.c.b16 %v1100, %v1096
    %v1393 = vpack.c.b16 %v1105, %v1101
    %v1394 = vpack.c.b16 %v1106, %v1102
    %v1395 = vpack.c.b16 %v1107, %v1103
    %v1396 = vpack.c.b16 %v1108, %v1104
    %v1397 = vpack.c.b16 %v1113, %v1109
    %v1398 = vpack.c.b16 %v1114, %v1110
    %v1399 = vpack.c.b16 %v1115, %v1111
    %v1400 = vpack.c.b16 %v1116, %v1112
    %v1401 = vpack.c.b16 %v1121, %v1117
    %v1402 = vpack.c.b16 %v1122, %v1118
    %v1403 = vpack.c.b16 %v1123, %v1119
    %v1404 = vpack.c.b16 %v1124, %v1120
    %v1405 = vpack.c.b16 %v1129, %v1125
    %v1406 = vpack.c.b16 %v1130, %v1126
    %v1407 = vpack.c.b16 %v1131, %v1127
    %v1408 = vpack.c.b16 %v1132, %v1128
    %v1409 = vpack.c.b16 %v1137, %v1133
    %v1410 = vpack.c.b16 %v1138, %v1134
    %v1411 = vpack.c.b16 %v1139, %v1135
    %v1412 = vpack.c.b16 %v1140, %v1136
    %v1413 = vpack.c.b16 %v1145, %v1141
    %v1414 = vpack.c.b16 %v1146, %v1142
    %v1415 = vpack.c.b16 %v1147, %v1143
    %v1416 = vpack.c.b16 %v1148, %v1144
    %v1417 = vpack.c.b16 %v1153, %v1149
    %v1418 = vpack.c.b16 %v1154, %v1150
    %v1419 = vpack.c.b16 %v1155, %v1151
    %v1420 = vpack.c.b16 %v1156, %v1152
    %v1421 = vpack.c.b16 %v1161, %v1157
    %v1422 = vpack.c.b16 %v1162, %v1158
    %v1423 = vpack.c.b16 %v1163, %v1159
    %v1424 = vpack.c.b16 %v1164, %v1160
    %v1425 = vpack.c.b16 %v1169, %v1165
    %v1426 = vpack.c.b16 %v1170, %v1166
    %v1427 = vpack.c.b16 %v1171, %v1167
    %v1428 = vpack.c.b16 %v1172, %v1168
    %1685 = vmatpush.bf16.msra.mxu0 %v1201
    %1686 = vmatpush.bf16.msra.mxu0 %v1197
    %1687 = vmatpush.bf16.msra.mxu0 %v1193
    %1688 = vmatpush.bf16.msra.mxu0 %v1189
    %1689 = vmatpush.bf16.msra.mxu0 %v1185
    %1690 = vmatpush.bf16.msra.mxu0 %v1181
    %1691 = vmatpush.bf16.msra.mxu0 %v1177
    %1692 = vmatpush.bf16.msra.mxu0 %v1173
    %1693 = vmatmul.bf16.gmra.mxu0 %v131
    %v1694 = vpop.f32.mrf.mxu0
    %v1695 = vadd.f32 %v397, %v1694
    %v1696 = vpop.f32.mrf.mxu0
    %1697 = vdwg.mxu0
    %1698 = vmatpush.bf16.msra.mxu0 %v1233
    %1699 = vmatpush.bf16.msra.mxu0 %v1229
    %1700 = vmatpush.bf16.msra.mxu0 %v1225
    %1701 = vmatpush.bf16.msra.mxu0 %v1221
    %1702 = vmatpush.bf16.msra.mxu0 %v1217
    %1703 = vmatpush.bf16.msra.mxu0 %v1213
    %1704 = vmatpush.bf16.msra.mxu0 %v1209
    %1705 = vmatpush.bf16.msra.mxu0 %v1205
    %1706 = vmatmul.bf16.gmra.mxu0 %v132
    %v1707 = vpop.f32.mrf.mxu0
    %v1708 = vadd.f32 %v1695, %v1707
    %v1709 = vpop.f32.mrf.mxu0
    %1710 = vdwg.mxu0
    %1711 = vmatpush.bf16.msra.mxu0 %v1265
    %1712 = vmatpush.bf16.msra.mxu0 %v1261
    %1713 = vmatpush.bf16.msra.mxu0 %v1257
    %1714 = vmatpush.bf16.msra.mxu0 %v1253
    %1715 = vmatpush.bf16.msra.mxu0 %v1249
    %1716 = vmatpush.bf16.msra.mxu0 %v1245
    %1717 = vmatpush.bf16.msra.mxu0 %v1241
    %1718 = vmatpush.bf16.msra.mxu0 %v1237
    %1719 = vmatmul.bf16.gmra.mxu0 %v133
    %v1720 = vpop.f32.mrf.mxu0
    %v1721 = vadd.f32 %v1708, %v1720
    %v1722 = vpop.f32.mrf.mxu0
    %1723 = vdwg.mxu0
    %1724 = vmatpush.bf16.msra.mxu0 %v1297
    %1725 = vmatpush.bf16.msra.mxu0 %v1293
    %1726 = vmatpush.bf16.msra.mxu0 %v1289
    %1727 = vmatpush.bf16.msra.mxu0 %v1285
    %1728 = vmatpush.bf16.msra.mxu0 %v1281
    %1729 = vmatpush.bf16.msra.mxu0 %v1277
    %1730 = vmatpush.bf16.msra.mxu0 %v1273
    %1731 = vmatpush.bf16.msra.mxu0 %v1269
    %1732 = vmatmul.bf16.gmra.mxu0 %v134
    %v1733 = vpop.f32.mrf.mxu0
    %v1734 = vadd.f32 %v1721, %v1733
    %v1735 = vpop.f32.mrf.mxu0
    %1736 = vdwg.mxu0
    %1737 = vmatpush.bf16.msra.mxu0 %v1329
    %1738 = vmatpush.bf16.msra.mxu0 %v1325
    %1739 = vmatpush.bf16.msra.mxu0 %v1321
    %1740 = vmatpush.bf16.msra.mxu0 %v1317
    %1741 = vmatpush.bf16.msra.mxu0 %v1313
    %1742 = vmatpush.bf16.msra.mxu0 %v1309
    %1743 = vmatpush.bf16.msra.mxu0 %v1305
    %1744 = vmatpush.bf16.msra.mxu0 %v1301
    %1745 = vmatmul.bf16.gmra.mxu0 %v135
    %v1746 = vpop.f32.mrf.mxu0
    %v1747 = vadd.f32 %v1734, %v1746
    %v1748 = vpop.f32.mrf.mxu0
    %1749 = vdwg.mxu0
    %1750 = vmatpush.bf16.msra.mxu0 %v1361
    %1751 = vmatpush.bf16.msra.mxu0 %v1357
    %1752 = vmatpush.bf16.msra.mxu0 %v1353
    %1753 = vmatpush.bf16.msra.mxu0 %v1349
    %1754 = vmatpush.bf16.msra.mxu0 %v1345
    %1755 = vmatpush.bf16.msra.mxu0 %v1341
    %1756 = vmatpush.bf16.msra.mxu0 %v1337
    %1757 = vmatpush.bf16.msra.mxu0 %v1333
    %1758 = vmatmul.bf16.gmra.mxu0 %v136
    %v1759 = vpop.f32.mrf.mxu0
    %v1760 = vadd.f32 %v1747, %v1759
    %v1761 = vpop.f32.mrf.mxu0
    %1762 = vdwg.mxu0
    %1763 = vmatpush.bf16.msra.mxu0 %v1393
    %1764 = vmatpush.bf16.msra.mxu0 %v1389
    %1765 = vmatpush.bf16.msra.mxu0 %v1385
    %1766 = vmatpush.bf16.msra.mxu0 %v1381
    %1767 = vmatpush.bf16.msra.mxu0 %v1377
    %1768 = vmatpush.bf16.msra.mxu0 %v1373
    %1769 = vmatpush.bf16.msra.mxu0 %v1369
    %1770 = vmatpush.bf16.msra.mxu0 %v1365
    %1771 = vmatmul.bf16.gmra.mxu0 %v137
    %v1772 = vpop.f32.mrf.mxu0
    %v1773 = vadd.f32 %v1760, %v1772
    %v1774 = vpop.f32.mrf.mxu0
    %1775 = vdwg.mxu0
    %1776 = vmatpush.bf16.msra.mxu0 %v1425
    %1777 = vmatpush.bf16.msra.mxu0 %v1421
    %1778 = vmatpush.bf16.msra.mxu0 %v1417
    %1779 = vmatpush.bf16.msra.mxu0 %v1413
    %1780 = vmatpush.bf16.msra.mxu0 %v1409
    %1781 = vmatpush.bf16.msra.mxu0 %v1405
    %1782 = vmatpush.bf16.msra.mxu0 %v1401
    %1783 = vmatpush.bf16.msra.mxu0 %v1397
    %1784 = vmatmul.bf16.gmra.mxu0 %v138
    %v1785 = vpop.f32.mrf.mxu0
    %v1786 = vadd.f32 %v1773, %v1785
    %v1787 = vpop.f32.mrf.mxu0
    %1788 = vdwg.mxu0
    %1789 = vmatpush.bf16.msra.mxu0 %v1202
    %1790 = vmatpush.bf16.msra.mxu0 %v1198
    %1791 = vmatpush.bf16.msra.mxu0 %v1194
    %1792 = vmatpush.bf16.msra.mxu0 %v1190
    %1793 = vmatpush.bf16.msra.mxu0 %v1186
    %1794 = vmatpush.bf16.msra.mxu0 %v1182
    %1795 = vmatpush.bf16.msra.mxu0 %v1178
    %1796 = vmatpush.bf16.msra.mxu0 %v1174
    %1797 = vmatmul.bf16.gmra.mxu0 %v131
    %v1798 = vpop.f32.mrf.mxu0
    %v1799 = vadd.f32 %v398, %v1798
    %v1800 = vpop.f32.mrf.mxu0
    %1801 = vdwg.mxu0
    %1802 = vmatpush.bf16.msra.mxu0 %v1234
    %1803 = vmatpush.bf16.msra.mxu0 %v1230
    %1804 = vmatpush.bf16.msra.mxu0 %v1226
    %1805 = vmatpush.bf16.msra.mxu0 %v1222
    %1806 = vmatpush.bf16.msra.mxu0 %v1218
    %1807 = vmatpush.bf16.msra.mxu0 %v1214
    %1808 = vmatpush.bf16.msra.mxu0 %v1210
    %1809 = vmatpush.bf16.msra.mxu0 %v1206
    %1810 = vmatmul.bf16.gmra.mxu0 %v132
    %v1811 = vpop.f32.mrf.mxu0
    %v1812 = vadd.f32 %v1799, %v1811
    %v1813 = vpop.f32.mrf.mxu0
    %1814 = vdwg.mxu0
    %1815 = vmatpush.bf16.msra.mxu0 %v1266
    %1816 = vmatpush.bf16.msra.mxu0 %v1262
    %1817 = vmatpush.bf16.msra.mxu0 %v1258
    %1818 = vmatpush.bf16.msra.mxu0 %v1254
    %1819 = vmatpush.bf16.msra.mxu0 %v1250
    %1820 = vmatpush.bf16.msra.mxu0 %v1246
    %1821 = vmatpush.bf16.msra.mxu0 %v1242
    %1822 = vmatpush.bf16.msra.mxu0 %v1238
    %1823 = vmatmul.bf16.gmra.mxu0 %v133
    %v1824 = vpop.f32.mrf.mxu0
    %v1825 = vadd.f32 %v1812, %v1824
    %v1826 = vpop.f32.mrf.mxu0
    %1827 = vdwg.mxu0
    %1828 = vmatpush.bf16.msra.mxu0 %v1298
    %1829 = vmatpush.bf16.msra.mxu0 %v1294
    %1830 = vmatpush.bf16.msra.mxu0 %v1290
    %1831 = vmatpush.bf16.msra.mxu0 %v1286
    %1832 = vmatpush.bf16.msra.mxu0 %v1282
    %1833 = vmatpush.bf16.msra.mxu0 %v1278
    %1834 = vmatpush.bf16.msra.mxu0 %v1274
    %1835 = vmatpush.bf16.msra.mxu0 %v1270
    %1836 = vmatmul.bf16.gmra.mxu0 %v134
    %v1837 = vpop.f32.mrf.mxu0
    %v1838 = vadd.f32 %v1825, %v1837
    %v1839 = vpop.f32.mrf.mxu0
    %1840 = vdwg.mxu0
    %1841 = vmatpush.bf16.msra.mxu0 %v1330
    %1842 = vmatpush.bf16.msra.mxu0 %v1326
    %1843 = vmatpush.bf16.msra.mxu0 %v1322
    %1844 = vmatpush.bf16.msra.mxu0 %v1318
    %1845 = vmatpush.bf16.msra.mxu0 %v1314
    %1846 = vmatpush.bf16.msra.mxu0 %v1310
    %1847 = vmatpush.bf16.msra.mxu0 %v1306
    %1848 = vmatpush.bf16.msra.mxu0 %v1302
    %1849 = vmatmul.bf16.gmra.mxu0 %v135
    %v1850 = vpop.f32.mrf.mxu0
    %v1851 = vadd.f32 %v1838, %v1850
    %v1852 = vpop.f32.mrf.mxu0
    %1853 = vdwg.mxu0
    %1854 = vmatpush.bf16.msra.mxu0 %v1362
    %1855 = vmatpush.bf16.msra.mxu0 %v1358
    %1856 = vmatpush.bf16.msra.mxu0 %v1354
    %1857 = vmatpush.bf16.msra.mxu0 %v1350
    %1858 = vmatpush.bf16.msra.mxu0 %v1346
    %1859 = vmatpush.bf16.msra.mxu0 %v1342
    %1860 = vmatpush.bf16.msra.mxu0 %v1338
    %1861 = vmatpush.bf16.msra.mxu0 %v1334
    %1862 = vmatmul.bf16.gmra.mxu0 %v136
    %v1863 = vpop.f32.mrf.mxu0
    %v1864 = vadd.f32 %v1851, %v1863
    %v1865 = vpop.f32.mrf.mxu0
    %1866 = vdwg.mxu0
    %1867 = vmatpush.bf16.msra.mxu0 %v1394
    %1868 = vmatpush.bf16.msra.mxu0 %v1390
    %1869 = vmatpush.bf16.msra.mxu0 %v1386
    %1870 = vmatpush.bf16.msra.mxu0 %v1382
    %1871 = vmatpush.bf16.msra.mxu0 %v1378
    %1872 = vmatpush.bf16.msra.mxu0 %v1374
    %1873 = vmatpush.bf16.msra.mxu0 %v1370
    %1874 = vmatpush.bf16.msra.mxu0 %v1366
    %1875 = vmatmul.bf16.gmra.mxu0 %v137
    %v1876 = vpop.f32.mrf.mxu0
    %v1877 = vadd.f32 %v1864, %v1876
    %v1878 = vpop.f32.mrf.mxu0
    %1879 = vdwg.mxu0
    %1880 = vmatpush.bf16.msra.mxu0 %v1426
    %1881 = vmatpush.bf16.msra.mxu0 %v1422
    %1882 = vmatpush.bf16.msra.mxu0 %v1418
    %1883 = vmatpush.bf16.msra.mxu0 %v1414
    %1884 = vmatpush.bf16.msra.mxu0 %v1410
    %1885 = vmatpush.bf16.msra.mxu0 %v1406
    %1886 = vmatpush.bf16.msra.mxu0 %v1402
    %1887 = vmatpush.bf16.msra.mxu0 %v1398
    %1888 = vmatmul.bf16.gmra.mxu0 %v138
    %v1889 = vpop.f32.mrf.mxu0
    %v1890 = vadd.f32 %v1877, %v1889
    %v1891 = vpop.f32.mrf.mxu0
    %1892 = vdwg.mxu0
    %1893 = vmatpush.bf16.msra.mxu0 %v1203
    %1894 = vmatpush.bf16.msra.mxu0 %v1199
    %1895 = vmatpush.bf16.msra.mxu0 %v1195
    %1896 = vmatpush.bf16.msra.mxu0 %v1191
    %1897 = vmatpush.bf16.msra.mxu0 %v1187
    %1898 = vmatpush.bf16.msra.mxu0 %v1183
    %1899 = vmatpush.bf16.msra.mxu0 %v1179
    %1900 = vmatpush.bf16.msra.mxu0 %v1175
    %1901 = vmatmul.bf16.gmra.mxu0 %v131
    %v1902 = vpop.f32.mrf.mxu0
    %v1903 = vadd.f32 %v399, %v1902
    %v1904 = vpop.f32.mrf.mxu0
    %1905 = vdwg.mxu0
    %1906 = vmatpush.bf16.msra.mxu0 %v1235
    %1907 = vmatpush.bf16.msra.mxu0 %v1231
    %1908 = vmatpush.bf16.msra.mxu0 %v1227
    %1909 = vmatpush.bf16.msra.mxu0 %v1223
    %1910 = vmatpush.bf16.msra.mxu0 %v1219
    %1911 = vmatpush.bf16.msra.mxu0 %v1215
    %1912 = vmatpush.bf16.msra.mxu0 %v1211
    %1913 = vmatpush.bf16.msra.mxu0 %v1207
    %1914 = vmatmul.bf16.gmra.mxu0 %v132
    %v1915 = vpop.f32.mrf.mxu0
    %v1916 = vadd.f32 %v1903, %v1915
    %v1917 = vpop.f32.mrf.mxu0
    %1918 = vdwg.mxu0
    %1919 = vmatpush.bf16.msra.mxu0 %v1267
    %1920 = vmatpush.bf16.msra.mxu0 %v1263
    %1921 = vmatpush.bf16.msra.mxu0 %v1259
    %1922 = vmatpush.bf16.msra.mxu0 %v1255
    %1923 = vmatpush.bf16.msra.mxu0 %v1251
    %1924 = vmatpush.bf16.msra.mxu0 %v1247
    %1925 = vmatpush.bf16.msra.mxu0 %v1243
    %1926 = vmatpush.bf16.msra.mxu0 %v1239
    %1927 = vmatmul.bf16.gmra.mxu0 %v133
    %v1928 = vpop.f32.mrf.mxu0
    %v1929 = vadd.f32 %v1916, %v1928
    %v1930 = vpop.f32.mrf.mxu0
    %1931 = vdwg.mxu0
    %1932 = vmatpush.bf16.msra.mxu0 %v1299
    %1933 = vmatpush.bf16.msra.mxu0 %v1295
    %1934 = vmatpush.bf16.msra.mxu0 %v1291
    %1935 = vmatpush.bf16.msra.mxu0 %v1287
    %1936 = vmatpush.bf16.msra.mxu0 %v1283
    %1937 = vmatpush.bf16.msra.mxu0 %v1279
    %1938 = vmatpush.bf16.msra.mxu0 %v1275
    %1939 = vmatpush.bf16.msra.mxu0 %v1271
    %1940 = vmatmul.bf16.gmra.mxu0 %v134
    %v1941 = vpop.f32.mrf.mxu0
    %v1942 = vadd.f32 %v1929, %v1941
    %v1943 = vpop.f32.mrf.mxu0
    %1944 = vdwg.mxu0
    %1945 = vmatpush.bf16.msra.mxu0 %v1331
    %1946 = vmatpush.bf16.msra.mxu0 %v1327
    %1947 = vmatpush.bf16.msra.mxu0 %v1323
    %1948 = vmatpush.bf16.msra.mxu0 %v1319
    %1949 = vmatpush.bf16.msra.mxu0 %v1315
    %1950 = vmatpush.bf16.msra.mxu0 %v1311
    %1951 = vmatpush.bf16.msra.mxu0 %v1307
    %1952 = vmatpush.bf16.msra.mxu0 %v1303
    %1953 = vmatmul.bf16.gmra.mxu0 %v135
    %v1954 = vpop.f32.mrf.mxu0
    %v1955 = vadd.f32 %v1942, %v1954
    %v1956 = vpop.f32.mrf.mxu0
    %1957 = vdwg.mxu0
    %1958 = vmatpush.bf16.msra.mxu0 %v1363
    %1959 = vmatpush.bf16.msra.mxu0 %v1359
    %1960 = vmatpush.bf16.msra.mxu0 %v1355
    %1961 = vmatpush.bf16.msra.mxu0 %v1351
    %1962 = vmatpush.bf16.msra.mxu0 %v1347
    %1963 = vmatpush.bf16.msra.mxu0 %v1343
    %1964 = vmatpush.bf16.msra.mxu0 %v1339
    %1965 = vmatpush.bf16.msra.mxu0 %v1335
    %1966 = vmatmul.bf16.gmra.mxu0 %v136
    %v1967 = vpop.f32.mrf.mxu0
    %v1968 = vadd.f32 %v1955, %v1967
    %v1969 = vpop.f32.mrf.mxu0
    %1970 = vdwg.mxu0
    %1971 = vmatpush.bf16.msra.mxu0 %v1395
    %1972 = vmatpush.bf16.msra.mxu0 %v1391
    %1973 = vmatpush.bf16.msra.mxu0 %v1387
    %1974 = vmatpush.bf16.msra.mxu0 %v1383
    %1975 = vmatpush.bf16.msra.mxu0 %v1379
    %1976 = vmatpush.bf16.msra.mxu0 %v1375
    %1977 = vmatpush.bf16.msra.mxu0 %v1371
    %1978 = vmatpush.bf16.msra.mxu0 %v1367
    %1979 = vmatmul.bf16.gmra.mxu0 %v137
    %v1980 = vpop.f32.mrf.mxu0
    %v1981 = vadd.f32 %v1968, %v1980
    %v1982 = vpop.f32.mrf.mxu0
    %1983 = vdwg.mxu0
    %1984 = vmatpush.bf16.msra.mxu0 %v1427
    %1985 = vmatpush.bf16.msra.mxu0 %v1423
    %1986 = vmatpush.bf16.msra.mxu0 %v1419
    %1987 = vmatpush.bf16.msra.mxu0 %v1415
    %1988 = vmatpush.bf16.msra.mxu0 %v1411
    %1989 = vmatpush.bf16.msra.mxu0 %v1407
    %1990 = vmatpush.bf16.msra.mxu0 %v1403
    %1991 = vmatpush.bf16.msra.mxu0 %v1399
    %1992 = vmatmul.bf16.gmra.mxu0 %v138
    %v1993 = vpop.f32.mrf.mxu0
    %v1994 = vadd.f32 %v1981, %v1993
    %v1995 = vpop.f32.mrf.mxu0
    %1996 = vdwg.mxu0
    %1997 = vmatpush.bf16.msra.mxu0 %v1204
    %1998 = vmatpush.bf16.msra.mxu0 %v1200
    %1999 = vmatpush.bf16.msra.mxu0 %v1196
    %2000 = vmatpush.bf16.msra.mxu0 %v1192
    %2001 = vmatpush.bf16.msra.mxu0 %v1188
    %2002 = vmatpush.bf16.msra.mxu0 %v1184
    %2003 = vmatpush.bf16.msra.mxu0 %v1180
    %2004 = vmatpush.bf16.msra.mxu0 %v1176
    %2005 = vmatmul.bf16.gmra.mxu0 %v131
    %v2006 = vpop.f32.mrf.mxu0
    %v2007 = vadd.f32 %v400, %v2006
    %v2008 = vpop.f32.mrf.mxu0
    %2009 = vdwg.mxu0
    %2010 = vmatpush.bf16.msra.mxu0 %v1236
    %2011 = vmatpush.bf16.msra.mxu0 %v1232
    %2012 = vmatpush.bf16.msra.mxu0 %v1228
    %2013 = vmatpush.bf16.msra.mxu0 %v1224
    %2014 = vmatpush.bf16.msra.mxu0 %v1220
    %2015 = vmatpush.bf16.msra.mxu0 %v1216
    %2016 = vmatpush.bf16.msra.mxu0 %v1212
    %2017 = vmatpush.bf16.msra.mxu0 %v1208
    %2018 = vmatmul.bf16.gmra.mxu0 %v132
    %v2019 = vpop.f32.mrf.mxu0
    %v2020 = vadd.f32 %v2007, %v2019
    %v2021 = vpop.f32.mrf.mxu0
    %2022 = vdwg.mxu0
    %2023 = vmatpush.bf16.msra.mxu0 %v1268
    %2024 = vmatpush.bf16.msra.mxu0 %v1264
    %2025 = vmatpush.bf16.msra.mxu0 %v1260
    %2026 = vmatpush.bf16.msra.mxu0 %v1256
    %2027 = vmatpush.bf16.msra.mxu0 %v1252
    %2028 = vmatpush.bf16.msra.mxu0 %v1248
    %2029 = vmatpush.bf16.msra.mxu0 %v1244
    %2030 = vmatpush.bf16.msra.mxu0 %v1240
    %2031 = vmatmul.bf16.gmra.mxu0 %v133
    %v2032 = vpop.f32.mrf.mxu0
    %v2033 = vadd.f32 %v2020, %v2032
    %v2034 = vpop.f32.mrf.mxu0
    %2035 = vdwg.mxu0
    %2036 = vmatpush.bf16.msra.mxu0 %v1300
    %2037 = vmatpush.bf16.msra.mxu0 %v1296
    %2038 = vmatpush.bf16.msra.mxu0 %v1292
    %2039 = vmatpush.bf16.msra.mxu0 %v1288
    %2040 = vmatpush.bf16.msra.mxu0 %v1284
    %2041 = vmatpush.bf16.msra.mxu0 %v1280
    %2042 = vmatpush.bf16.msra.mxu0 %v1276
    %2043 = vmatpush.bf16.msra.mxu0 %v1272
    %2044 = vmatmul.bf16.gmra.mxu0 %v134
    %v2045 = vpop.f32.mrf.mxu0
    %v2046 = vadd.f32 %v2033, %v2045
    %v2047 = vpop.f32.mrf.mxu0
    %2048 = vdwg.mxu0
    %2049 = vmatpush.bf16.msra.mxu0 %v1332
    %2050 = vmatpush.bf16.msra.mxu0 %v1328
    %2051 = vmatpush.bf16.msra.mxu0 %v1324
    %2052 = vmatpush.bf16.msra.mxu0 %v1320
    %2053 = vmatpush.bf16.msra.mxu0 %v1316
    %2054 = vmatpush.bf16.msra.mxu0 %v1312
    %2055 = vmatpush.bf16.msra.mxu0 %v1308
    %2056 = vmatpush.bf16.msra.mxu0 %v1304
    %2057 = vmatmul.bf16.gmra.mxu0 %v135
    %v2058 = vpop.f32.mrf.mxu0
    %v2059 = vadd.f32 %v2046, %v2058
    %v2060 = vpop.f32.mrf.mxu0
    %2061 = vdwg.mxu0
    %2062 = vmatpush.bf16.msra.mxu0 %v1364
    %2063 = vmatpush.bf16.msra.mxu0 %v1360
    %2064 = vmatpush.bf16.msra.mxu0 %v1356
    %2065 = vmatpush.bf16.msra.mxu0 %v1352
    %2066 = vmatpush.bf16.msra.mxu0 %v1348
    %2067 = vmatpush.bf16.msra.mxu0 %v1344
    %2068 = vmatpush.bf16.msra.mxu0 %v1340
    %2069 = vmatpush.bf16.msra.mxu0 %v1336
    %2070 = vmatmul.bf16.gmra.mxu0 %v136
    %v2071 = vpop.f32.mrf.mxu0
    %v2072 = vadd.f32 %v2059, %v2071
    %v2073 = vpop.f32.mrf.mxu0
    %2074 = vdwg.mxu0
    %2075 = vmatpush.bf16.msra.mxu0 %v1396
    %2076 = vmatpush.bf16.msra.mxu0 %v1392
    %2077 = vmatpush.bf16.msra.mxu0 %v1388
    %2078 = vmatpush.bf16.msra.mxu0 %v1384
    %2079 = vmatpush.bf16.msra.mxu0 %v1380
    %2080 = vmatpush.bf16.msra.mxu0 %v1376
    %2081 = vmatpush.bf16.msra.mxu0 %v1372
    %2082 = vmatpush.bf16.msra.mxu0 %v1368
    %2083 = vmatmul.bf16.gmra.mxu0 %v137
    %v2084 = vpop.f32.mrf.mxu0
    %v2085 = vadd.f32 %v2072, %v2084
    %v2086 = vpop.f32.mrf.mxu0
    %2087 = vdwg.mxu0
    %2088 = vmatpush.bf16.msra.mxu0 %v1428
    %2089 = vmatpush.bf16.msra.mxu0 %v1424
    %2090 = vmatpush.bf16.msra.mxu0 %v1420
    %2091 = vmatpush.bf16.msra.mxu0 %v1416
    %2092 = vmatpush.bf16.msra.mxu0 %v1412
    %2093 = vmatpush.bf16.msra.mxu0 %v1408
    %2094 = vmatpush.bf16.msra.mxu0 %v1404
    %2095 = vmatpush.bf16.msra.mxu0 %v1400
    %2096 = vmatmul.bf16.gmra.mxu0 %v138
    %v2097 = vpop.f32.mrf.mxu0
    %v2098 = vadd.f32 %v2085, %v2097
    %v2099 = vpop.f32.mrf.mxu0
    %2100 = vdwg.mxu0
    %v2101 = vmax.f32 %v1786, 0.0
    %v2102 = vmax.f32 %v1890, 0.0
    %v2103 = vmax.f32 %v1994, 0.0
    %v2104 = vmax.f32 %v2098, 0.0
    %v2105 = vpack.c.bf16 %v2101, %v2101
    %v2106 = vpack.c.bf16 %v2102, %v2102
    %v2107 = vpack.c.bf16 %v2103, %v2103
    %v2108 = vpack.c.bf16 %v2104, %v2104
    %v2109 = vld [vmem:[#allocation8] sm:$0xff]
    %v2110 = vld [vmem:[#allocation8 + $0x8] sm:$0xff]
    %v2111 = vld [vmem:[#allocation8 + $0x10] sm:$0xff]
    %v2112 = vld [vmem:[#allocation8 + $0x18] sm:$0xff]
    %v2113 = vld [vmem:[#allocation8 + $0x20] sm:$0xff]
    %v2114 = vld [vmem:[#allocation8 + $0x28] sm:$0xff]
    %v2115 = vld [vmem:[#allocation8 + $0x30] sm:$0xff]
    %v2116 = vld [vmem:[#allocation8 + $0x38] sm:$0xff]
    %v2117 = vld [vmem:[#allocation8 + $0x40] sm:$0xff]
    %v2118 = vld [vmem:[#allocation8 + $0x48] sm:$0xff]
    %v2119 = vld [vmem:[#allocation8 + $0x50] sm:$0xff]
    %v2120 = vld [vmem:[#allocation8 + $0x58] sm:$0xff]
    %v2121 = vld [vmem:[#allocation8 + $0x60] sm:$0xff]
    %v2122 = vld [vmem:[#allocation8 + $0x68] sm:$0xff]
    %v2123 = vld [vmem:[#allocation8 + $0x70] sm:$0xff]
    %v2124 = vld [vmem:[#allocation8 + $0x78] sm:$0xff]
    %v2125 = vld [vmem:[#allocation8 + $0x80] sm:$0xff]
    %v2126 = vld [vmem:[#allocation8 + $0x88] sm:$0xff]
    %v2127 = vld [vmem:[#allocation8 + $0x90] sm:$0xff]
    %v2128 = vld [vmem:[#allocation8 + $0x98] sm:$0xff]
    %v2129 = vld [vmem:[#allocation8 + $0xa0] sm:$0xff]
    %v2130 = vld [vmem:[#allocation8 + $0xa8] sm:$0xff]
    %v2131 = vld [vmem:[#allocation8 + $0xb0] sm:$0xff]
    %v2132 = vld [vmem:[#allocation8 + $0xb8] sm:$0xff]
    %v2133 = vld [vmem:[#allocation8 + $0xc0] sm:$0xff]
    %v2134 = vld [vmem:[#allocation8 + $0xc8] sm:$0xff]
    %v2135 = vld [vmem:[#allocation8 + $0xd0] sm:$0xff]
    %v2136 = vld [vmem:[#allocation8 + $0xd8] sm:$0xff]
    %v2137 = vld [vmem:[#allocation8 + $0xe0] sm:$0xff]
    %v2138 = vld [vmem:[#allocation8 + $0xe8] sm:$0xff]
    %v2139 = vld [vmem:[#allocation8 + $0xf0] sm:$0xff]
    %v2140 = vld [vmem:[#allocation8 + $0xf8] sm:$0xff]
    %v2141 = vld [vmem:[#allocation8 + $0x100] sm:$0xff]
    %v2142 = vld [vmem:[#allocation8 + $0x108] sm:$0xff]
    %v2143 = vld [vmem:[#allocation8 + $0x110] sm:$0xff]
    %v2144 = vld [vmem:[#allocation8 + $0x118] sm:$0xff]
    %v2145 = vld [vmem:[#allocation8 + $0x120] sm:$0xff]
    %v2146 = vld [vmem:[#allocation8 + $0x128] sm:$0xff]
    %v2147 = vld [vmem:[#allocation8 + $0x130] sm:$0xff]
    %v2148 = vld [vmem:[#allocation8 + $0x138] sm:$0xff]
    %v2149 = vld [vmem:[#allocation8 + $0x140] sm:$0xff]
    %v2150 = vld [vmem:[#allocation8 + $0x148] sm:$0xff]
    %v2151 = vld [vmem:[#allocation8 + $0x150] sm:$0xff]
    %v2152 = vld [vmem:[#allocation8 + $0x158] sm:$0xff]
    %v2153 = vld [vmem:[#allocation8 + $0x160] sm:$0xff]
    %v2154 = vld [vmem:[#allocation8 + $0x168] sm:$0xff]
    %v2155 = vld [vmem:[#allocation8 + $0x170] sm:$0xff]
    %v2156 = vld [vmem:[#allocation8 + $0x178] sm:$0xff]
    %v2157 = vld [vmem:[#allocation8 + $0x180] sm:$0xff]
    %v2158 = vld [vmem:[#allocation8 + $0x188] sm:$0xff]
    %v2159 = vld [vmem:[#allocation8 + $0x190] sm:$0xff]
    %v2160 = vld [vmem:[#allocation8 + $0x198] sm:$0xff]
    %v2161 = vld [vmem:[#allocation8 + $0x1a0] sm:$0xff]
    %v2162 = vld [vmem:[#allocation8 + $0x1a8] sm:$0xff]
    %v2163 = vld [vmem:[#allocation8 + $0x1b0] sm:$0xff]
    %v2164 = vld [vmem:[#allocation8 + $0x1b8] sm:$0xff]
    %v2165 = vld [vmem:[#allocation8 + $0x1c0] sm:$0xff]
    %v2166 = vld [vmem:[#allocation8 + $0x1c8] sm:$0xff]
    %v2167 = vld [vmem:[#allocation8 + $0x1d0] sm:$0xff]
    %v2168 = vld [vmem:[#allocation8 + $0x1d8] sm:$0xff]
    %v2169 = vld [vmem:[#allocation8 + $0x1e0] sm:$0xff]
    %v2170 = vld [vmem:[#allocation8 + $0x1e8] sm:$0xff]
    %v2171 = vld [vmem:[#allocation8 + $0x1f0] sm:$0xff]
    %v2172 = vld [vmem:[#allocation8 + $0x1f8] sm:$0xff]
    %v2173 = vld [vmem:[%s4] sm:$0x3]
    %v2175 = vperm.slane %v2173, 0
    %v2176 = vperm.slane %v2173, 1
    %v2243 = vunpack.c.l.b16 %v2109
    %v2244 = vunpack.c.h.b16 %v2109
    %v2245 = vunpack.c.l.b16 %v2110
    %v2246 = vunpack.c.h.b16 %v2110
    %v2247 = vunpack.c.l.b16 %v2111
    %v2248 = vunpack.c.h.b16 %v2111
    %v2249 = vunpack.c.l.b16 %v2112
    %v2250 = vunpack.c.h.b16 %v2112
    %v2251 = vunpack.c.l.b16 %v2113
    %v2252 = vunpack.c.h.b16 %v2113
    %v2253 = vunpack.c.l.b16 %v2114
    %v2254 = vunpack.c.h.b16 %v2114
    %v2255 = vunpack.c.l.b16 %v2115
    %v2256 = vunpack.c.h.b16 %v2115
    %v2257 = vunpack.c.l.b16 %v2116
    %v2258 = vunpack.c.h.b16 %v2116
    %v2259 = vunpack.c.l.b16 %v2117
    %v2260 = vunpack.c.h.b16 %v2117
    %v2261 = vunpack.c.l.b16 %v2118
    %v2262 = vunpack.c.h.b16 %v2118
    %v2263 = vunpack.c.l.b16 %v2119
    %v2264 = vunpack.c.h.b16 %v2119
    %v2265 = vunpack.c.l.b16 %v2120
    %v2266 = vunpack.c.h.b16 %v2120
    %v2267 = vunpack.c.l.b16 %v2121
    %v2268 = vunpack.c.h.b16 %v2121
    %v2269 = vunpack.c.l.b16 %v2122
    %v2270 = vunpack.c.h.b16 %v2122
    %v2271 = vunpack.c.l.b16 %v2123
    %v2272 = vunpack.c.h.b16 %v2123
    %v2273 = vunpack.c.l.b16 %v2124
    %v2274 = vunpack.c.h.b16 %v2124
    %v2275 = vunpack.c.l.b16 %v2125
    %v2276 = vunpack.c.h.b16 %v2125
    %v2277 = vunpack.c.l.b16 %v2126
    %v2278 = vunpack.c.h.b16 %v2126
    %v2279 = vunpack.c.l.b16 %v2127
    %v2280 = vunpack.c.h.b16 %v2127
    %v2281 = vunpack.c.l.b16 %v2128
    %v2282 = vunpack.c.h.b16 %v2128
    %v2283 = vunpack.c.l.b16 %v2129
    %v2284 = vunpack.c.h.b16 %v2129
    %v2285 = vunpack.c.l.b16 %v2130
    %v2286 = vunpack.c.h.b16 %v2130
    %v2287 = vunpack.c.l.b16 %v2131
    %v2288 = vunpack.c.h.b16 %v2131
    %v2289 = vunpack.c.l.b16 %v2132
    %v2290 = vunpack.c.h.b16 %v2132
    %v2291 = vunpack.c.l.b16 %v2133
    %v2292 = vunpack.c.h.b16 %v2133
    %v2293 = vunpack.c.l.b16 %v2134
    %v2294 = vunpack.c.h.b16 %v2134
    %v2295 = vunpack.c.l.b16 %v2135
    %v2296 = vunpack.c.h.b16 %v2135
    %v2297 = vunpack.c.l.b16 %v2136
    %v2298 = vunpack.c.h.b16 %v2136
    %v2299 = vunpack.c.l.b16 %v2137
    %v2300 = vunpack.c.h.b16 %v2137
    %v2301 = vunpack.c.l.b16 %v2138
    %v2302 = vunpack.c.h.b16 %v2138
    %v2303 = vunpack.c.l.b16 %v2139
    %v2304 = vunpack.c.h.b16 %v2139
    %v2305 = vunpack.c.l.b16 %v2140
    %v2306 = vunpack.c.h.b16 %v2140
    %v2307 = vunpack.c.l.b16 %v2141
    %v2308 = vunpack.c.h.b16 %v2141
    %v2309 = vunpack.c.l.b16 %v2142
    %v2310 = vunpack.c.h.b16 %v2142
    %v2311 = vunpack.c.l.b16 %v2143
    %v2312 = vunpack.c.h.b16 %v2143
    %v2313 = vunpack.c.l.b16 %v2144
    %v2314 = vunpack.c.h.b16 %v2144
    %v2315 = vunpack.c.l.b16 %v2145
    %v2316 = vunpack.c.h.b16 %v2145
    %v2317 = vunpack.c.l.b16 %v2146
    %v2318 = vunpack.c.h.b16 %v2146
    %v2319 = vunpack.c.l.b16 %v2147
    %v2320 = vunpack.c.h.b16 %v2147
    %v2321 = vunpack.c.l.b16 %v2148
    %v2322 = vunpack.c.h.b16 %v2148
    %v2323 = vunpack.c.l.b16 %v2149
    %v2324 = vunpack.c.h.b16 %v2149
    %v2325 = vunpack.c.l.b16 %v2150
    %v2326 = vunpack.c.h.b16 %v2150
    %v2327 = vunpack.c.l.b16 %v2151
    %v2328 = vunpack.c.h.b16 %v2151
    %v2329 = vunpack.c.l.b16 %v2152
    %v2330 = vunpack.c.h.b16 %v2152
    %v2331 = vunpack.c.l.b16 %v2153
    %v2332 = vunpack.c.h.b16 %v2153
    %v2333 = vunpack.c.l.b16 %v2154
    %v2334 = vunpack.c.h.b16 %v2154
    %v2335 = vunpack.c.l.b16 %v2155
    %v2336 = vunpack.c.h.b16 %v2155
    %v2337 = vunpack.c.l.b16 %v2156
    %v2338 = vunpack.c.h.b16 %v2156
    %v2339 = vunpack.c.l.b16 %v2157
    %v2340 = vunpack.c.h.b16 %v2157
    %v2341 = vunpack.c.l.b16 %v2158
    %v2342 = vunpack.c.h.b16 %v2158
    %v2343 = vunpack.c.l.b16 %v2159
    %v2344 = vunpack.c.h.b16 %v2159
    %v2345 = vunpack.c.l.b16 %v2160
    %v2346 = vunpack.c.h.b16 %v2160
    %v2347 = vunpack.c.l.b16 %v2161
    %v2348 = vunpack.c.h.b16 %v2161
    %v2349 = vunpack.c.l.b16 %v2162
    %v2350 = vunpack.c.h.b16 %v2162
    %v2351 = vunpack.c.l.b16 %v2163
    %v2352 = vunpack.c.h.b16 %v2163
    %v2353 = vunpack.c.l.b16 %v2164
    %v2354 = vunpack.c.h.b16 %v2164
    %v2355 = vunpack.c.l.b16 %v2165
    %v2356 = vunpack.c.h.b16 %v2165
    %v2357 = vunpack.c.l.b16 %v2166
    %v2358 = vunpack.c.h.b16 %v2166
    %v2359 = vunpack.c.l.b16 %v2167
    %v2360 = vunpack.c.h.b16 %v2167
    %v2361 = vunpack.c.l.b16 %v2168
    %v2362 = vunpack.c.h.b16 %v2168
    %v2363 = vunpack.c.l.b16 %v2169
    %v2364 = vunpack.c.h.b16 %v2169
    %v2365 = vunpack.c.l.b16 %v2170
    %v2366 = vunpack.c.h.b16 %v2170
    %v2367 = vunpack.c.l.b16 %v2171
    %v2368 = vunpack.c.h.b16 %v2171
    %v2369 = vunpack.c.l.b16 %v2172
    %v2370 = vunpack.c.h.b16 %v2172
    %v2371 = vpack.c.b16 %v2245, %v2243
    %v2372 = vpack.c.b16 %v2246, %v2244
    %v2373 = vpack.c.b16 %v2249, %v2247
    %v2374 = vpack.c.b16 %v2250, %v2248
    %v2375 = vpack.c.b16 %v2253, %v2251
    %v2376 = vpack.c.b16 %v2254, %v2252
    %v2377 = vpack.c.b16 %v2257, %v2255
    %v2378 = vpack.c.b16 %v2258, %v2256
    %v2379 = vpack.c.b16 %v2261, %v2259
    %v2380 = vpack.c.b16 %v2262, %v2260
    %v2381 = vpack.c.b16 %v2265, %v2263
    %v2382 = vpack.c.b16 %v2266, %v2264
    %v2383 = vpack.c.b16 %v2269, %v2267
    %v2384 = vpack.c.b16 %v2270, %v2268
    %v2385 = vpack.c.b16 %v2273, %v2271
    %v2386 = vpack.c.b16 %v2274, %v2272
    %v2387 = vpack.c.b16 %v2277, %v2275
    %v2388 = vpack.c.b16 %v2278, %v2276
    %v2389 = vpack.c.b16 %v2281, %v2279
    %v2390 = vpack.c.b16 %v2282, %v2280
    %v2391 = vpack.c.b16 %v2285, %v2283
    %v2392 = vpack.c.b16 %v2286, %v2284
    %v2393 = vpack.c.b16 %v2289, %v2287
    %v2394 = vpack.c.b16 %v2290, %v2288
    %v2395 = vpack.c.b16 %v2293, %v2291
    %v2396 = vpack.c.b16 %v2294, %v2292
    %v2397 = vpack.c.b16 %v2297, %v2295
    %v2398 = vpack.c.b16 %v2298, %v2296
    %v2399 = vpack.c.b16 %v2301, %v2299
    %v2400 = vpack.c.b16 %v2302, %v2300
    %v2401 = vpack.c.b16 %v2305, %v2303
    %v2402 = vpack.c.b16 %v2306, %v2304
    %v2403 = vpack.c.b16 %v2309, %v2307
    %v2404 = vpack.c.b16 %v2310, %v2308
    %v2405 = vpack.c.b16 %v2313, %v2311
    %v2406 = vpack.c.b16 %v2314, %v2312
    %v2407 = vpack.c.b16 %v2317, %v2315
    %v2408 = vpack.c.b16 %v2318, %v2316
    %v2409 = vpack.c.b16 %v2321, %v2319
    %v2410 = vpack.c.b16 %v2322, %v2320
    %v2411 = vpack.c.b16 %v2325, %v2323
    %v2412 = vpack.c.b16 %v2326, %v2324
    %v2413 = vpack.c.b16 %v2329, %v2327
    %v2414 = vpack.c.b16 %v2330, %v2328
    %v2415 = vpack.c.b16 %v2333, %v2331
    %v2416 = vpack.c.b16 %v2334, %v2332
    %v2417 = vpack.c.b16 %v2337, %v2335
    %v2418 = vpack.c.b16 %v2338, %v2336
    %v2419 = vpack.c.b16 %v2341, %v2339
    %v2420 = vpack.c.b16 %v2342, %v2340
    %v2421 = vpack.c.b16 %v2345, %v2343
    %v2422 = vpack.c.b16 %v2346, %v2344
    %v2423 = vpack.c.b16 %v2349, %v2347
    %v2424 = vpack.c.b16 %v2350, %v2348
    %v2425 = vpack.c.b16 %v2353, %v2351
    %v2426 = vpack.c.b16 %v2354, %v2352
    %v2427 = vpack.c.b16 %v2357, %v2355
    %v2428 = vpack.c.b16 %v2358, %v2356
    %v2429 = vpack.c.b16 %v2361, %v2359
    %v2430 = vpack.c.b16 %v2362, %v2360
    %v2431 = vpack.c.b16 %v2365, %v2363
    %v2432 = vpack.c.b16 %v2366, %v2364
    %v2433 = vpack.c.b16 %v2369, %v2367
    %v2434 = vpack.c.b16 %v2370, %v2368
    %2499 = vmatpush.bf16.msra.mxu0 %v2385
    %2500 = vmatpush.bf16.msra.mxu0 %v2383
    %2501 = vmatpush.bf16.msra.mxu0 %v2381
    %2502 = vmatpush.bf16.msra.mxu0 %v2379
    %2503 = vmatpush.bf16.msra.mxu0 %v2377
    %2504 = vmatpush.bf16.msra.mxu0 %v2375
    %2505 = vmatpush.bf16.msra.mxu0 %v2373
    %2506 = vmatpush.bf16.msra.mxu0 %v2371
    %2507 = vmatmul.bf16.gmra.mxu0 %v2105
    %v2508 = vpop.f32.mrf.mxu0
    %v2509 = vadd.f32 %v2175, %v2508
    %v2510 = vpop.f32.mrf.mxu0
    %2511 = vdwg.mxu0
    %2512 = vmatpush.bf16.msra.mxu0 %v2401
    %2513 = vmatpush.bf16.msra.mxu0 %v2399
    %2514 = vmatpush.bf16.msra.mxu0 %v2397
    %2515 = vmatpush.bf16.msra.mxu0 %v2395
    %2516 = vmatpush.bf16.msra.mxu0 %v2393
    %2517 = vmatpush.bf16.msra.mxu0 %v2391
    %2518 = vmatpush.bf16.msra.mxu0 %v2389
    %2519 = vmatpush.bf16.msra.mxu0 %v2387
    %2520 = vmatmul.bf16.gmra.mxu0 %v2106
    %v2521 = vpop.f32.mrf.mxu0
    %v2522 = vadd.f32 %v2509, %v2521
    %v2523 = vpop.f32.mrf.mxu0
    %2524 = vdwg.mxu0
    %2525 = vmatpush.bf16.msra.mxu0 %v2417
    %2526 = vmatpush.bf16.msra.mxu0 %v2415
    %2527 = vmatpush.bf16.msra.mxu0 %v2413
    %2528 = vmatpush.bf16.msra.mxu0 %v2411
    %2529 = vmatpush.bf16.msra.mxu0 %v2409
    %2530 = vmatpush.bf16.msra.mxu0 %v2407
    %2531 = vmatpush.bf16.msra.mxu0 %v2405
    %2532 = vmatpush.bf16.msra.mxu0 %v2403
    %2533 = vmatmul.bf16.gmra.mxu0 %v2107
    %v2534 = vpop.f32.mrf.mxu0
    %v2535 = vadd.f32 %v2522, %v2534
    %v2536 = vpop.f32.mrf.mxu0
    %2537 = vdwg.mxu0
    %2538 = vmatpush.bf16.msra.mxu0 %v2433
    %2539 = vmatpush.bf16.msra.mxu0 %v2431
    %2540 = vmatpush.bf16.msra.mxu0 %v2429
    %2541 = vmatpush.bf16.msra.mxu0 %v2427
    %2542 = vmatpush.bf16.msra.mxu0 %v2425
    %2543 = vmatpush.bf16.msra.mxu0 %v2423
    %2544 = vmatpush.bf16.msra.mxu0 %v2421
    %2545 = vmatpush.bf16.msra.mxu0 %v2419
    %2546 = vmatmul.bf16.gmra.mxu0 %v2108
    %v2547 = vpop.f32.mrf.mxu0
    %v2548 = vadd.f32 %v2535, %v2547
    %v2549 = vpop.f32.mrf.mxu0
    %2550 = vdwg.mxu0
    %2551 = vmatpush.bf16.msra.mxu0 %v2386
    %2552 = vmatpush.bf16.msra.mxu0 %v2384
    %2553 = vmatpush.bf16.msra.mxu0 %v2382
    %2554 = vmatpush.bf16.msra.mxu0 %v2380
    %2555 = vmatpush.bf16.msra.mxu0 %v2378
    %2556 = vmatpush.bf16.msra.mxu0 %v2376
    %2557 = vmatpush.bf16.msra.mxu0 %v2374
    %2558 = vmatpush.bf16.msra.mxu0 %v2372
    %2559 = vmatmul.bf16.gmra.mxu0 %v2105
    %v2560 = vpop.f32.mrf.mxu0
    %v2561 = vadd.f32 %v2176, %v2560
    %v2562 = vpop.f32.mrf.mxu0
    %2563 = vdwg.mxu0
    %2564 = vmatpush.bf16.msra.mxu0 %v2402
    %2565 = vmatpush.bf16.msra.mxu0 %v2400
    %2566 = vmatpush.bf16.msra.mxu0 %v2398
    %2567 = vmatpush.bf16.msra.mxu0 %v2396
    %2568 = vmatpush.bf16.msra.mxu0 %v2394
    %2569 = vmatpush.bf16.msra.mxu0 %v2392
    %2570 = vmatpush.bf16.msra.mxu0 %v2390
    %2571 = vmatpush.bf16.msra.mxu0 %v2388
    %2572 = vmatmul.bf16.gmra.mxu0 %v2106
    %v2573 = vpop.f32.mrf.mxu0
    %v2574 = vadd.f32 %v2561, %v2573
    %v2575 = vpop.f32.mrf.mxu0
    %2576 = vdwg.mxu0
    %2577 = vmatpush.bf16.msra.mxu0 %v2418
    %2578 = vmatpush.bf16.msra.mxu0 %v2416
    %2579 = vmatpush.bf16.msra.mxu0 %v2414
    %2580 = vmatpush.bf16.msra.mxu0 %v2412
    %2581 = vmatpush.bf16.msra.mxu0 %v2410
    %2582 = vmatpush.bf16.msra.mxu0 %v2408
    %2583 = vmatpush.bf16.msra.mxu0 %v2406
    %2584 = vmatpush.bf16.msra.mxu0 %v2404
    %2585 = vmatmul.bf16.gmra.mxu0 %v2107
    %v2586 = vpop.f32.mrf.mxu0
    %v2587 = vadd.f32 %v2574, %v2586
    %v2588 = vpop.f32.mrf.mxu0
    %2589 = vdwg.mxu0
    %2590 = vmatpush.bf16.msra.mxu0 %v2434
    %2591 = vmatpush.bf16.msra.mxu0 %v2432
    %2592 = vmatpush.bf16.msra.mxu0 %v2430
    %2593 = vmatpush.bf16.msra.mxu0 %v2428
    %2594 = vmatpush.bf16.msra.mxu0 %v2426
    %2595 = vmatpush.bf16.msra.mxu0 %v2424
    %2596 = vmatpush.bf16.msra.mxu0 %v2422
    %2597 = vmatpush.bf16.msra.mxu0 %v2420
    %2598 = vmatmul.bf16.gmra.mxu0 %v2108
    %v2599 = vpop.f32.mrf.mxu0
    %v2600 = vadd.f32 %v2587, %v2599
    %v2601 = vpop.f32.mrf.mxu0
    %2602 = vdwg.mxu0
    %v2603 = vmax.f32 %v2548, 0.0
    %v2604 = vmax.f32 %v2600, 0.0
    %v2605 = vpack.c.bf16 %v2603, %v2603
    %v2606 = vpack.c.bf16 %v2604, %v2604
    %v2607 = vld [vmem:[#allocation10] sm:$0xf]
    %v2608 = vld [vmem:[#allocation10 + $0x4] sm:$0xf]
    %v2609 = vld [vmem:[#allocation10 + $0x8] sm:$0xf]
    %v2610 = vld [vmem:[#allocation10 + $0xc] sm:$0xf]
    %v2611 = vld [vmem:[#allocation10 + $0x10] sm:$0xf]
    %v2612 = vld [vmem:[#allocation10 + $0x14] sm:$0xf]
    %v2613 = vld [vmem:[#allocation10 + $0x18] sm:$0xf]
    %v2614 = vld [vmem:[#allocation10 + $0x1c] sm:$0xf]
    %v2615 = vld [vmem:[#allocation10 + $0x20] sm:$0xf]
    %v2616 = vld [vmem:[#allocation10 + $0x24] sm:$0xf]
    %v2617 = vld [vmem:[#allocation10 + $0x28] sm:$0xf]
    %v2618 = vld [vmem:[#allocation10 + $0x2c] sm:$0xf]
    %v2619 = vld [vmem:[#allocation10 + $0x30] sm:$0xf]
    %v2620 = vld [vmem:[#allocation10 + $0x34] sm:$0xf]
    %v2621 = vld [vmem:[#allocation10 + $0x38] sm:$0xf]
    %v2622 = vld [vmem:[#allocation10 + $0x3c] sm:$0xf]
    %v2623 = vld [vmem:[#allocation10 + $0x40] sm:$0xf]
    %v2624 = vld [vmem:[#allocation10 + $0x44] sm:$0xf]
    %v2625 = vld [vmem:[#allocation10 + $0x48] sm:$0xf]
    %v2626 = vld [vmem:[#allocation10 + $0x4c] sm:$0xf]
    %v2627 = vld [vmem:[#allocation10 + $0x50] sm:$0xf]
    %v2628 = vld [vmem:[#allocation10 + $0x54] sm:$0xf]
    %v2629 = vld [vmem:[#allocation10 + $0x58] sm:$0xf]
    %v2630 = vld [vmem:[#allocation10 + $0x5c] sm:$0xf]
    %v2631 = vld [vmem:[#allocation10 + $0x60] sm:$0xf]
    %v2632 = vld [vmem:[#allocation10 + $0x64] sm:$0xf]
    %v2633 = vld [vmem:[#allocation10 + $0x68] sm:$0xf]
    %v2634 = vld [vmem:[#allocation10 + $0x6c] sm:$0xf]
    %v2635 = vld [vmem:[#allocation10 + $0x70] sm:$0xf]
    %v2636 = vld [vmem:[#allocation10 + $0x74] sm:$0xf]
    %v2637 = vld [vmem:[#allocation10 + $0x78] sm:$0xf]
    %v2638 = vld [vmem:[#allocation10 + $0x7c] sm:$0xf]
    %v2639 = vld [vmem:[%s6] sm:$0x1]
    %v2641 = vperm.slane %v2639, 0
    %v2675 = vunpack.c.l.b16 %v2607
    %v2676 = vunpack.c.l.b16 %v2608
    %v2677 = vunpack.c.l.b16 %v2609
    %v2678 = vunpack.c.l.b16 %v2610
    %v2679 = vunpack.c.l.b16 %v2611
    %v2680 = vunpack.c.l.b16 %v2612
    %v2681 = vunpack.c.l.b16 %v2613
    %v2682 = vunpack.c.l.b16 %v2614
    %v2683 = vunpack.c.l.b16 %v2615
    %v2684 = vunpack.c.l.b16 %v2616
    %v2685 = vunpack.c.l.b16 %v2617
    %v2686 = vunpack.c.l.b16 %v2618
    %v2687 = vunpack.c.l.b16 %v2619
    %v2688 = vunpack.c.l.b16 %v2620
    %v2689 = vunpack.c.l.b16 %v2621
    %v2690 = vunpack.c.l.b16 %v2622
    %v2691 = vunpack.c.l.b16 %v2623
    %v2692 = vunpack.c.l.b16 %v2624
    %v2693 = vunpack.c.l.b16 %v2625
    %v2694 = vunpack.c.l.b16 %v2626
    %v2695 = vunpack.c.l.b16 %v2627
    %v2696 = vunpack.c.l.b16 %v2628
    %v2697 = vunpack.c.l.b16 %v2629
    %v2698 = vunpack.c.l.b16 %v2630
    %v2699 = vunpack.c.l.b16 %v2631
    %v2700 = vunpack.c.l.b16 %v2632
    %v2701 = vunpack.c.l.b16 %v2633
    %v2702 = vunpack.c.l.b16 %v2634
    %v2703 = vunpack.c.l.b16 %v2635
    %v2704 = vunpack.c.l.b16 %v2636
    %v2705 = vunpack.c.l.b16 %v2637
    %v2706 = vunpack.c.l.b16 %v2638
    %v2707 = vpack.c.b16 %v2676, %v2675
    %v2708 = vpack.c.b16 %v2678, %v2677
    %v2709 = vpack.c.b16 %v2680, %v2679
    %v2710 = vpack.c.b16 %v2682, %v2681
    %v2711 = vpack.c.b16 %v2684, %v2683
    %v2712 = vpack.c.b16 %v2686, %v2685
    %v2713 = vpack.c.b16 %v2688, %v2687
    %v2714 = vpack.c.b16 %v2690, %v2689
    %v2715 = vpack.c.b16 %v2692, %v2691
    %v2716 = vpack.c.b16 %v2694, %v2693
    %v2717 = vpack.c.b16 %v2696, %v2695
    %v2718 = vpack.c.b16 %v2698, %v2697
    %v2719 = vpack.c.b16 %v2700, %v2699
    %v2720 = vpack.c.b16 %v2702, %v2701
    %v2721 = vpack.c.b16 %v2704, %v2703
    %v2722 = vpack.c.b16 %v2706, %v2705
    %2739 = vmatpush.bf16.msra.mxu0 %v2714
    %2740 = vmatpush.bf16.msra.mxu0 %v2713
    %2741 = vmatpush.bf16.msra.mxu0 %v2712
    %2742 = vmatpush.bf16.msra.mxu0 %v2711
    %2743 = vmatpush.bf16.msra.mxu0 %v2710
    %2744 = vmatpush.bf16.msra.mxu0 %v2709
    %2745 = vmatpush.bf16.msra.mxu0 %v2708
    %2746 = vmatpush.bf16.msra.mxu0 %v2707
    %2747 = vmatmul.bf16.gmra.mxu0 %v2605
    %v2748 = vpop.f32.mrf.mxu0
    %v2749 = vadd.f32 %v2641, %v2748
    %v2750 = vpop.f32.mrf.mxu0
    %2751 = vdwg.mxu0
    %2752 = vmatpush.bf16.msra.mxu0 %v2722
    %2753 = vmatpush.bf16.msra.mxu0 %v2721
    %2754 = vmatpush.bf16.msra.mxu0 %v2720
    %2755 = vmatpush.bf16.msra.mxu0 %v2719
    %2756 = vmatpush.bf16.msra.mxu0 %v2718
    %2757 = vmatpush.bf16.msra.mxu0 %v2717
    %2758 = vmatpush.bf16.msra.mxu0 %v2716
    %2759 = vmatpush.bf16.msra.mxu0 %v2715
    %2760 = vmatmul.bf16.gmra.mxu0 %v2606
    %v2761 = vpop.f32.mrf.mxu0
    %v2762 = vadd.f32 %v2749, %v2761
    %v2763 = vpop.f32.mrf.mxu0
    %2764 = vdwg.mxu0
    %v2765 = vmax.f32 %v2762, 0.0
    %v2766 = vpack.c.bf16 %v2765, %v2765
    %v2767 = vld [vmem:[#allocation11] sm:$0xf]
    %v2768 = vld [vmem:[#allocation11 + $0x4] sm:$0xf]
    %v2769 = vld [vmem:[#allocation11 + $0x8] sm:$0xf]
    %v2770 = vld [vmem:[#allocation11 + $0xc] sm:$0xf]
    %v2771 = vld [vmem:[#allocation11 + $0x10] sm:$0xf]
    %v2772 = vld [vmem:[#allocation11 + $0x14] sm:$0xf]
    %v2773 = vld [vmem:[#allocation11 + $0x18] sm:$0xf]
    %v2774 = vld [vmem:[#allocation11 + $0x1c] sm:$0xf]
    %v2775 = vld [vmem:[#allocation11 + $0x20] sm:$0xf]
    %v2776 = vld [vmem:[#allocation11 + $0x24] sm:$0xf]
    %v2777 = vld [vmem:[#allocation11 + $0x28] sm:$0xf]
    %v2778 = vld [vmem:[#allocation11 + $0x2c] sm:$0xf]
    %v2779 = vld [vmem:[#allocation11 + $0x30] sm:$0xf]
    %v2780 = vld [vmem:[#allocation11 + $0x34] sm:$0xf]
    %v2781 = vld [vmem:[#allocation11 + $0x38] sm:$0xf]
    %v2782 = vld [vmem:[#allocation11 + $0x3c] sm:$0xf]
    %v2783 = vld [vmem:[%s8] sm:$0x1]
    %v2785 = vperm.slane %v2783, 0
    %v2803 = vunpack.c.l.b16 %v2767
    %v2804 = vunpack.c.l.b16 %v2768
    %v2805 = vunpack.c.l.b16 %v2769
    %v2806 = vunpack.c.l.b16 %v2770
    %v2807 = vunpack.c.l.b16 %v2771
    %v2808 = vunpack.c.l.b16 %v2772
    %v2809 = vunpack.c.l.b16 %v2773
    %v2810 = vunpack.c.l.b16 %v2774
    %v2811 = vunpack.c.l.b16 %v2775
    %v2812 = vunpack.c.l.b16 %v2776
    %v2813 = vunpack.c.l.b16 %v2777
    %v2814 = vunpack.c.l.b16 %v2778
    %v2815 = vunpack.c.l.b16 %v2779
    %v2816 = vunpack.c.l.b16 %v2780
    %v2817 = vunpack.c.l.b16 %v2781
    %v2818 = vunpack.c.l.b16 %v2782
    %v2819 = vpack.c.b16 %v2804, %v2803
    %v2820 = vpack.c.b16 %v2806, %v2805
    %v2821 = vpack.c.b16 %v2808, %v2807
    %v2822 = vpack.c.b16 %v2810, %v2809
    %v2823 = vpack.c.b16 %v2812, %v2811
    %v2824 = vpack.c.b16 %v2814, %v2813
    %v2825 = vpack.c.b16 %v2816, %v2815
    %v2826 = vpack.c.b16 %v2818, %v2817
    %2835 = vmatpush.bf16.msra.mxu0 %v2826
    %2836 = vmatpush.bf16.msra.mxu0 %v2825
    %2837 = vmatpush.bf16.msra.mxu0 %v2824
    %2838 = vmatpush.bf16.msra.mxu0 %v2823
    %2839 = vmatpush.bf16.msra.mxu0 %v2822
    %2840 = vmatpush.bf16.msra.mxu0 %v2821
    %2841 = vmatpush.bf16.msra.mxu0 %v2820
    %2842 = vmatpush.bf16.msra.mxu0 %v2819
    %2843 = vmatmul.bf16.gmra.mxu0 %v2766
    %v2844 = vpop.f32.mrf.mxu0
    %v2845 = vadd.f32 %v2785, %v2844
    %v2846 = vpop.f32.mrf.mxu0
    %2847 = vdwg.mxu0
    %v2848 = vpack.c.bf16 %v2845, %v2845
    %2849 = vst [vmem:[#allocation13] sm:$0xf] %v2848
    // Predicated region
    $region62: #{tpu_custom_call.1} parent=1 // pred_check
      _
    $region63: #{tpu_custom_call.1} parent=1 // pred_check_branch
      %2851 = sbr.rel (0) target = $region65
    $region64: #{tpu_custom_call.1} parent=1 // pred_region
      %2853 = vsyncadd [#allocation4], 0
      %s2855 = sshll.u32 [#allocation13], 4
      %s2856 = int_to_ptr.vmem [resolvable:$true] %s2855
      %s2857 = sshll.u32 %s9, 4
      %s2858 = int_to_ptr.hbm [resolvable:$true] %s2857
      %2860 = dma.vmem_to_hbm [thread:$0]  %s2856, 64, %s2858, [#allocation4]
    $region65: #{tpu_custom_call.1} parent=1 // pred_fallthru
      _
    // Predicated region
    $region66: #{tpu_custom_call.1} parent=1 // pred_check
      _
    $region67: #{tpu_custom_call.1} parent=1 // pred_check_branch
      %2862 = sbr.rel (0) target = $region69
    $region68: #{tpu_custom_call.1} parent=1 // pred_region
      %2864 = dma.done [#allocation4], 64
    $region69: #{tpu_custom_call.1} parent=1 // pred_fallthru
      _
    %2865 = vsyncpa [#allocation3], 1
    %2866 = vsyncpa [#allocation6], 1
    %2867 = vsyncpa [#allocation9], 1
    %2868 = vsyncpa [#allocation12], 1
    %2869 = vsyncpa [#allocation4], 1

</llo_original>
